<compile_context>
chip_gen: v7x
topology: tpu7x:2x2x1
jax: 0.10.0
libtpu: 0.0.40
codegen_flags: <defaults>
</compile_context>

<pallas_src>
import math
import functools

import jax
import jax.numpy as jnp
from jax.experimental import pallas as pl
from jax.experimental.pallas import tpu as pltpu


def self_attention_kernel(x_ref, mask_ref, wqkv_ref, bqkv_ref, o_ref,
                          q_sc, k_sc, v_sc, *, num_heads, head_dim, q_tile):
    """Grid = (batch, query_tile). All refs live in VMEM.

    x_ref:    (1, S, H)   full sequence for this batch element
    mask_ref: (1, 1, S)   additive mask, already (1 - m) * -10000
    wqkv_ref: (H, 3H)     fused [Wq/sqrt(d) | Wk | Wv] in compute dtype
    bqkv_ref: (1, 3H)     fused bias (f32), bq pre-scaled by 1/sqrt(d)
    o_ref:    (1, TQ, H)  output tile
    q_sc:     (nh, S, d)  head-major, pre-scaled Q (once per batch element)
    k_sc:     (nh, S, d)  head-major K
    v_sc:     (nh, S, d)  head-major V
    """
    qi = pl.program_id(1)
    S = x_ref.shape[1]
    H = num_heads * head_dim
    cdt = q_sc.dtype

    # ---- once per batch element: fused QKV projection + head-major repack ----
    @pl.when(qi == 0)
    def _():
        x = x_ref[0].astype(cdt)                                    # (S, H)
        qkv = jnp.dot(x, wqkv_ref[...],
                      preferred_element_type=jnp.float32) + bqkv_ref[...]

        def to_heads(y):                                            # (S,H)->(nh,S,d)
            return jnp.transpose(y.reshape(S, num_heads, head_dim),
                                 (1, 0, 2)).astype(cdt)

        q_sc[...] = to_heads(qkv[:, :H])          # 1/sqrt(d) already folded in
        k_sc[...] = to_heads(qkv[:, H:2 * H])
        v_sc[...] = to_heads(qkv[:, 2 * H:])

    # ---- per query tile: all heads at once, softmax in f32 ----
    mask_add = mask_ref[0].astype(jnp.float32)                      # (1, S)
    row0 = pl.multiple_of(qi * q_tile, q_tile)
    qh = q_sc[:, pl.ds(row0, q_tile), :]                            # (nh, TQ, d)

    scores = jnp.einsum('hqd,hkd->hqk', qh, k_sc[...],
                        preferred_element_type=jnp.float32)         # (nh, TQ, S)
    scores = scores + mask_add[None, :, :]
    m = jnp.max(scores, axis=-1, keepdims=True)
    p = jnp.exp(scores - m)
    l = jnp.sum(p, axis=-1, keepdims=True)
    # TODO(synk): attention-probs dropout is an eval-mode no-op here; training
    # would draw a mask via pltpu.prng_seed / pltpu.prng_random_bits.
    ctx = jnp.einsum('hqk,hkd->hqd', p.astype(cdt), v_sc[...],
                     preferred_element_type=jnp.float32)            # (nh, TQ, d)
    # Normalize AFTER PV; switch to approx=True when tolerance allows (EUP win).
    ctx = ctx * pl.reciprocal(l, approx=False)
    out = jnp.transpose(ctx, (1, 0, 2)).reshape(q_tile, H)          # lane-dense
    o_ref[0] = out.astype(o_ref.dtype)


def _pick_q_tile(seq_len):
    # Full sequence for short inputs; otherwise a sublane-friendly tile that
    # bounds the (nh, TQ, S) score working set (re-derive for v7x's 64 MiB VMEM).
    if seq_len <= 512:
        return seq_len
    for tq in (512, 256, 128):
        if seq_len % tq == 0:
            return tq
    return seq_len


def self_attention(hidden_states, attention_mask, params, *, num_heads,
                   compute_dtype=None):
    """hidden_states: (B, S, H); attention_mask: (B, S) of 0/1."""
    B, S, H = hidden_states.shape
    assert H % num_heads == 0
    head_dim = H // num_heads
    cdt = (jnp.dtype(compute_dtype) if compute_dtype is not None
           else hidden_states.dtype)

    wq, bq, wk, bk, wv, bv = params
    # Fused QKV weight/bias -> one wide MXU matmul, single weight block in VMEM.
    # 1/sqrt(d) is folded into the Q slice here (one-time op on the weights),
    # so the kernel has zero per-token scaling work.
    inv_sqrt_d = 1.0 / math.sqrt(head_dim)
    wqkv = jnp.concatenate([wq * inv_sqrt_d, wk, wv], axis=1).astype(cdt)
    bqkv = jnp.concatenate([bq * inv_sqrt_d, bk, bv]).reshape(1, 3 * H)
    bqkv = bqkv.astype(jnp.float32)
    # Additive mask precomputed once (no per-step (1-m)*-1e4 VPU work).
    mask_add = (1.0 - attention_mask.astype(jnp.float32)).reshape(B, 1, S)
    mask_add = mask_add * -10000.0

    q_tile = _pick_q_tile(S)
    num_q_tiles = S // q_tile

    kernel = functools.partial(self_attention_kernel,
                               num_heads=num_heads, head_dim=head_dim,
                               q_tile=q_tile)

    return pl.pallas_call(
        kernel,
        out_shape=jax.ShapeDtypeStruct((B, S, H), hidden_states.dtype),
        grid_spec=pltpu.PrefetchScalarGridSpec(
            num_scalar_prefetch=0,
            grid=(B, num_q_tiles),
            in_specs=[
                pl.BlockSpec((1, S, H), lambda b, qi: (b, 0, 0)),   # x (full seq)
                pl.BlockSpec((1, 1, S), lambda b, qi: (b, 0, 0)),   # additive mask
                pl.BlockSpec((H, 3 * H), lambda b, qi: (0, 0)),     # fused W_qkv
                pl.BlockSpec((1, 3 * H), lambda b, qi: (0, 0)),     # fused b_qkv
            ],
            out_specs=pl.BlockSpec((1, q_tile, H), lambda b, qi: (b, qi, 0)),
            scratch_shapes=[
                pltpu.VMEM((num_heads, S, head_dim), cdt),      # head-major Q
                pltpu.VMEM((num_heads, S, head_dim), cdt),      # head-major K
                pltpu.VMEM((num_heads, S, head_dim), cdt),      # head-major V
            ],
        ),
        # Batch axis shards across megacore TCs; the query-tile axis reuses the
        # per-batch QKV scratch, so it must stay "arbitrary".
        compiler_params=pltpu.CompilerParams(
            dimension_semantics=("parallel", "arbitrary")),
    )(hidden_states, mask_add, wqkv, bqkv)


def reference_self_attention(hidden_states, attention_mask, params, *, num_heads):
    """Pure-JAX reference mirroring the PyTorch forward (eval mode)."""
    B, S, H = hidden_states.shape
    d = H // num_heads
    wq, bq, wk, bk, wv, bv = params
    mask = (1.0 - attention_mask.reshape(B, 1, 1, S)) * -10000.0

    def split(x):  # (B, S, H) -> (B, nh, S, d)
        return x.reshape(B, S, num_heads, d).transpose(0, 2, 1, 3)

    q = split(hidden_states @ wq + bq)
    k = split(hidden_states @ wk + bk)
    v = split(hidden_states @ wv + bv)
    scores = jnp.einsum("bhqd,bhkd->bhqk", q, k) / math.sqrt(d) + mask
    probs = jax.nn.softmax(scores, axis=-1)
    ctx = jnp.einsum("bhqk,bhkd->bhqd", probs, v)
    return ctx.transpose(0, 2, 1, 3).reshape(B, S, H)


if __name__ == "__main__":
    # Small shapes consistent with the module: hidden=32, heads=4, seq=8, batch=2.
    B, S, H = 2, 8, 32
    num_heads = 4

    key = jax.random.PRNGKey(0)
    k_x, k_wq, k_bq, k_wk, k_bk, k_wv, k_bv, k_m = jax.random.split(key, 8)

    hidden_states = jax.random.normal(k_x, (B, S, H), dtype=jnp.float32)

    # Deterministic "Linear" parameters, stored so that y = x @ W + b
    # (i.e. W here corresponds to PyTorch weight.T).
    scale = 1.0 / math.sqrt(H)
    wq = jax.random.uniform(k_wq, (H, H), minval=-scale, maxval=scale)
    bq = jax.random.uniform(k_bq, (H,), minval=-scale, maxval=scale)
    wk = jax.random.uniform(k_wk, (H, H), minval=-scale, maxval=scale)
    bk = jax.random.uniform(k_bk, (H,), minval=-scale, maxval=scale)
    wv = jax.random.uniform(k_wv, (H, H), minval=-scale, maxval=scale)
    bv = jax.random.uniform(k_bv, (H,), minval=-scale, maxval=scale)
    params = (wq, bq, wk, bk, wv, bv)

    # Binary attention mask (1 = attend, 0 = masked); keep at least first token.
    attention_mask = (jax.random.uniform(k_m, (B, S)) > 0.3).astype(jnp.float32)
    attention_mask = attention_mask.at[:, 0].set(1.0)

    # Test keeps compute in f32; pass compute_dtype=jnp.bfloat16 on v6e/v7x.
    out = self_attention(hidden_states, attention_mask, params,
                         num_heads=num_heads)
    out = jax.block_until_ready(out)

    ref = reference_self_attention(hidden_states, attention_mask, params,
                                   num_heads=num_heads)
    assert out.shape == (B, S, H)
    assert jnp.allclose(out, ref, atol=2e-4, rtol=2e-4), "mismatch vs reference"

    print("KERNEL_OK")
</pallas_src>

<mosaic_0001>
module attributes {stable_mosaic.version = 11 : i64} {
  func.func @self_attention_kernel(%arg0: i32, %arg1: i32, %arg2: memref<1x8x32xf32, #tpu.memory_space<vmem>>, %arg3: memref<1x1x8xf32, #tpu.memory_space<vmem>>, %arg4: memref<32x96xf32, #tpu.memory_space<vmem>>, %arg5: memref<1x96xf32, #tpu.memory_space<vmem>>, %arg6: memref<1x8x32xf32, #tpu.memory_space<vmem>>, %arg7: memref<4x8x8xf32, #tpu.memory_space<vmem>>, %arg8: memref<4x8x8xf32, #tpu.memory_space<vmem>>, %arg9: memref<4x8x8xf32, #tpu.memory_space<vmem>>) attributes {dimension_semantics = [#tpu.dimension_semantics<parallel>, #tpu.dimension_semantics<arbitrary>], iteration_bounds = array<i64: 2, 1>, scalar_prefetch = 0 : i64, scratch_operands = 3 : i64, tpu.core_type = #tpu.core_type<tc>, window_params = [{transform_indices = @transform_0, window_bounds = array<i64: 1, 8, 32>}, {transform_indices = @transform_1, window_bounds = array<i64: 1, 1, 8>}, {pipeline_mode = #tpu.pipeline_mode<synchronous>, transform_indices = @transform_2, window_bounds = array<i64: 32, 96>}, {pipeline_mode = #tpu.pipeline_mode<synchronous>, transform_indices = @transform_3, window_bounds = array<i64: 1, 96>}, {transform_indices = @transform_4, window_bounds = array<i64: 1, 8, 32>}]} {
    %c0_i32 = arith.constant 0 : i32
    %0 = arith.cmpi eq, %arg1, %c0_i32 : i32
    %1 = arith.extui %0 : i1 to i32
    %c0_i32_0 = arith.constant 0 : i32
    %2 = arith.cmpi ne, %1, %c0_i32_0 : i32
    scf.if %2 {
      %c0_17 = arith.constant 0 : index
      %c0_18 = arith.constant 0 : index
      %c0_19 = arith.constant 0 : index
      %31 = vector.load %arg2[%c0_17, %c0_18, %c0_19] : memref<1x8x32xf32, #tpu.memory_space<vmem>>, vector<1x8x32xf32>
      %32 = vector.shape_cast %31 : vector<1x8x32xf32> to vector<8x32xf32>
      %c0_20 = arith.constant 0 : index
      %c0_21 = arith.constant 0 : index
      %33 = vector.load %arg4[%c0_20, %c0_21] : memref<32x96xf32, #tpu.memory_space<vmem>>, vector<32x96xf32>
      %cst_22 = arith.constant dense<0.000000e+00> : vector<8x96xf32>
      %34 = tpu.matmul %32, %33, %cst_22 {dimension_numbers = #tpu.dot_dimension_numbers<[1], [0], [0], [1], [0, 0, 1, 1], [], []>} : vector<8x32xf32>, vector<32x96xf32>, vector<8x96xf32> -> vector<8x96xf32>
      %c0_23 = arith.constant 0 : index
      %c0_24 = arith.constant 0 : index
      %35 = vector.load %arg5[%c0_23, %c0_24] : memref<1x96xf32, #tpu.memory_space<vmem>>, vector<1x96xf32>
      %36 = vector.broadcast %35 : vector<1x96xf32> to vector<8x96xf32>
      %37 = arith.addf %34, %36 : vector<8x96xf32>
      %38 = vector.extract_strided_slice %37 {offsets = [0, 0], sizes = [8, 32], strides = [1, 1]} : vector<8x96xf32> to vector<8x32xf32>
      %39 = vector.shape_cast %38 : vector<8x32xf32> to vector<8x4x8xf32>
      %40 = tpu.transpose %39, [1, 0, 2] : vector<8x4x8xf32> -> vector<4x8x8xf32>
      %c0_25 = arith.constant 0 : index
      %c0_26 = arith.constant 0 : index
      %c0_27 = arith.constant 0 : index
      %41 = vector.load %arg7[%c0_25, %c0_26, %c0_27] : memref<4x8x8xf32, #tpu.memory_space<vmem>>, vector<4x8x8xf32>
      tpu.vector_store %arg7[%c0_25, %c0_26, %c0_27], %40 {strides = array<i32>} : memref<4x8x8xf32, #tpu.memory_space<vmem>>, vector<4x8x8xf32>,
      %42 = vector.extract_strided_slice %37 {offsets = [0, 32], sizes = [8, 32], strides = [1, 1]} : vector<8x96xf32> to vector<8x32xf32>
      %43 = vector.shape_cast %42 : vector<8x32xf32> to vector<8x4x8xf32>
      %44 = tpu.transpose %43, [1, 0, 2] : vector<8x4x8xf32> -> vector<4x8x8xf32>
      %c0_28 = arith.constant 0 : index
      %c0_29 = arith.constant 0 : index
      %c0_30 = arith.constant 0 : index
      %45 = vector.load %arg8[%c0_28, %c0_29, %c0_30] : memref<4x8x8xf32, #tpu.memory_space<vmem>>, vector<4x8x8xf32>
      tpu.vector_store %arg8[%c0_28, %c0_29, %c0_30], %44 {strides = array<i32>} : memref<4x8x8xf32, #tpu.memory_space<vmem>>, vector<4x8x8xf32>,
      %46 = vector.extract_strided_slice %37 {offsets = [0, 64], sizes = [8, 32], strides = [1, 1]} : vector<8x96xf32> to vector<8x32xf32>
      %47 = vector.shape_cast %46 : vector<8x32xf32> to vector<8x4x8xf32>
      %48 = tpu.transpose %47, [1, 0, 2] : vector<8x4x8xf32> -> vector<4x8x8xf32>
      %c0_31 = arith.constant 0 : index
      %c0_32 = arith.constant 0 : index
      %c0_33 = arith.constant 0 : index
      %49 = vector.load %arg9[%c0_31, %c0_32, %c0_33] : memref<4x8x8xf32, #tpu.memory_space<vmem>>, vector<4x8x8xf32>
      tpu.vector_store %arg9[%c0_31, %c0_32, %c0_33], %48 {strides = array<i32>} : memref<4x8x8xf32, #tpu.memory_space<vmem>>, vector<4x8x8xf32>,
    } else {
    }
    %c0 = arith.constant 0 : index
    %c0_1 = arith.constant 0 : index
    %c0_2 = arith.constant 0 : index
    %3 = vector.load %arg3[%c0, %c0_1, %c0_2] : memref<1x1x8xf32, #tpu.memory_space<vmem>>, vector<1x1x8xf32>
    %4 = vector.shape_cast %3 : vector<1x1x8xf32> to vector<1x8xf32>
    %c8_i32 = arith.constant 8 : i32
    %5 = arith.muli %arg1, %c8_i32 : i32
    %6 = tpu.assume_multiple %5, 8 : i32
    %c0_3 = arith.constant 0 : index
    %7 = arith.index_cast %6 : i32 to index
    %c0_4 = arith.constant 0 : index
    %8 = vector.load %arg7[%c0_3, %7, %c0_4] : memref<4x8x8xf32, #tpu.memory_space<vmem>>, vector<4x8x8xf32>
    %c0_5 = arith.constant 0 : index
    %c0_6 = arith.constant 0 : index
    %c0_7 = arith.constant 0 : index
    %9 = vector.load %arg8[%c0_5, %c0_6, %c0_7] : memref<4x8x8xf32, #tpu.memory_space<vmem>>, vector<4x8x8xf32>
    "tpu.trace_start"() <{level = 10 : i32, message = "hqd,hkd->hqk"}> : () -> ()
    %cst = arith.constant dense<0.000000e+00> : vector<4x8x8xf32>
    %10 = tpu.matmul %8, %9, %cst {dimension_numbers = #tpu.dot_dimension_numbers<[2], [2], [1], [1], [0, 0, 0, 1, 1, 1], [0], [0]>} : vector<4x8x8xf32>, vector<4x8x8xf32>, vector<4x8x8xf32> -> vector<4x8x8xf32>
    "tpu.trace_stop"() : () -> ()
    %11 = vector.shape_cast %4 : vector<1x8xf32> to vector<1x1x8xf32>
    %12 = vector.broadcast %11 : vector<1x1x8xf32> to vector<4x8x8xf32>
    %13 = arith.addf %10, %12 : vector<4x8x8xf32>
    %cst_8 = arith.constant dense<0xFF800000> : vector<4x8xf32>
    %14 = vector.multi_reduction <maximumf>, %13, %cst_8 [2] : vector<4x8x8xf32> to vector<4x8xf32>
    %15 = vector.shape_cast %14 : vector<4x8xf32> to vector<4x8x1xf32>
    %16 = vector.broadcast %15 : vector<4x8x1xf32> to vector<4x8x8xf32>
    %17 = arith.subf %13, %16 : vector<4x8x8xf32>
    %18 = math.exp %17 : vector<4x8x8xf32>
    %cst_9 = arith.constant dense<0.000000e+00> : vector<4x8xf32>
    %19 = vector.multi_reduction <add>, %18, %cst_9 [2] : vector<4x8x8xf32> to vector<4x8xf32>
    %20 = vector.shape_cast %19 : vector<4x8xf32> to vector<4x8x1xf32>
    %c0_10 = arith.constant 0 : index
    %c0_11 = arith.constant 0 : index
    %c0_12 = arith.constant 0 : index
    %21 = vector.load %arg9[%c0_10, %c0_11, %c0_12] : memref<4x8x8xf32, #tpu.memory_space<vmem>>, vector<4x8x8xf32>
    "tpu.trace_start"() <{level = 10 : i32, message = "hqk,hkd->hqd"}> : () -> ()
    %cst_13 = arith.constant dense<0.000000e+00> : vector<4x8x8xf32>
    %22 = tpu.matmul %18, %21, %cst_13 {dimension_numbers = #tpu.dot_dimension_numbers<[2], [1], [1], [2], [0, 0, 0, 1, 1, 2], [0], [0]>} : vector<4x8x8xf32>, vector<4x8x8xf32>, vector<4x8x8xf32> -> vector<4x8x8xf32>
    "tpu.trace_stop"() : () -> ()
    %23 = tpu.reciprocal %20 : vector<4x8x1xf32> -> vector<4x8x1xf32>
    %24 = vector.broadcast %23 : vector<4x8x1xf32> to vector<4x8x8xf32>
    %25 = arith.mulf %22, %24 : vector<4x8x8xf32>
    %26 = tpu.transpose %25, [1, 0, 2] : vector<4x8x8xf32> -> vector<8x4x8xf32>
    %27 = vector.shape_cast %26 : vector<8x4x8xf32> to vector<8x32xf32>
    %c0_14 = arith.constant 0 : index
    %c0_15 = arith.constant 0 : index
    %c0_16 = arith.constant 0 : index
    %28 = vector.load %arg6[%c0_14, %c0_15, %c0_16] : memref<1x8x32xf32, #tpu.memory_space<vmem>>, vector<1x8x32xf32>
    %29 = vector.shape_cast %28 : vector<1x8x32xf32> to vector<8x32xf32>
    %30 = vector.shape_cast %27 : vector<8x32xf32> to vector<1x8x32xf32>
    tpu.vector_store %arg6[%c0_14, %c0_15, %c0_16], %30 {strides = array<i32>} : memref<1x8x32xf32, #tpu.memory_space<vmem>>, vector<1x8x32xf32>,
    return
  }
  func.func @transform_0(%arg0: i32, %arg1: i32) -> (i32, i32, i32) {
    %c0_i32 = arith.constant 0 : i32
    %c0_i32_0 = arith.constant 0 : i32
    %c0_i32_1 = arith.constant 0 : i32
    return %arg0, %c0_i32, %c0_i32_0 : i32, i32, i32
  }
  func.func @transform_1(%arg0: i32, %arg1: i32) -> (i32, i32, i32) {
    %c0_i32 = arith.constant 0 : i32
    %c0_i32_0 = arith.constant 0 : i32
    %c0_i32_1 = arith.constant 0 : i32
    return %arg0, %c0_i32, %c0_i32_0 : i32, i32, i32
  }
  func.func @transform_2(%arg0: i32, %arg1: i32) -> (i32, i32) {
    %c0_i32 = arith.constant 0 : i32
    %c0_i32_0 = arith.constant 0 : i32
    %c0_i32_1 = arith.constant 0 : i32
    return %c0_i32, %c0_i32_0 : i32, i32
  }
  func.func @transform_3(%arg0: i32, %arg1: i32) -> (i32, i32) {
    %c0_i32 = arith.constant 0 : i32
    %c0_i32_0 = arith.constant 0 : i32
    %c0_i32_1 = arith.constant 0 : i32
    return %c0_i32, %c0_i32_0 : i32, i32
  }
  func.func @transform_4(%arg0: i32, %arg1: i32) -> (i32, i32, i32) {
    %c0_i32 = arith.constant 0 : i32
    %c0_i32_0 = arith.constant 0 : i32
    return %arg0, %arg1, %c0_i32 : i32, i32, i32
  }
}

</mosaic_0001>

<llo_original>
// kernel: tpu_custom_call.1
$region0: #{tpu_custom_call.1}
  #allocation0 [shape = 'u32[]', space=smem, size = 0x4, offset = 0x4, fixed_abs, tag = 'smem constant byte address 0x4 - core index']
  #allocation1 [shape = 'u32[144,128]{1,0:T(1,128)}', space=vmem, size = 0x12000, scoped, tag = 'internal scratch']
  #allocation2 [shape = 'f32[4,8,8]{2,1,0:T(8,128)}', space=vmem, size = 0x4000, scoped, tag = 'scratch operand']
  #allocation3 [shape = 'f32[4,8,8]{2,1,0:T(8,128)}', space=vmem, size = 0x4000, scoped, tag = 'scratch operand']
  #allocation4 [shape = 'f32[4,8,8]{2,1,0:T(8,128)}', space=vmem, size = 0x4000, scoped, tag = 'scratch operand']
  %s0 = inlined_call_operand.hbm [shape: f32[2,8,32], index: 0, kind: input, shape index: {}]
  %s1 = inlined_call_operand.vmem [shape: f32[2,1,8], index: 1, kind: input, shape index: {}]
  %s2 = inlined_call_operand.hbm [shape: f32[32,96], index: 2, kind: input, shape index: {}]
  %s3 = inlined_call_operand.vmem [shape: f32[1,96], index: 3, kind: input, shape index: {}]
  %s4 = inlined_call_operand.hbm [shape: f32[2,8,32], index: 4, kind: output, shape index: {}]
  %s5 = sld [smem:[#allocation0]]
  $region61: #{tpu_custom_call.1} parent=0
    _
  %s7 = ssub.s32 1, %s5
  %s8 = scalar_select 0, %s7, %s5
  $region1: #{tpu_custom_call.1} parent=0
    #allocation5 [shape = 'u8[8192]{0}', space=vmem, size = 0x2000, scoped, tag = 'input window, operand 0']
    #allocation6 [shape = 's32[2]{0}', space=sflag, size = 0x8, scoped, tag = 'scoped memory for tpu_custom_call.1']
    #allocation7 [shape = 's32[2]{0}', space=sflag, size = 0x8, scoped, tag = 'scoped memory for tpu_custom_call.1']
    #allocation8 [shape = 'u8[16384]{0}', space=vmem, size = 0x4000, scoped, tag = 'input window, operand 2, single buffered']
    #allocation9 [shape = 's32[1]{0}', space=sflag, size = 0x4, scoped, tag = 'scoped memory for tpu_custom_call.1']
    #allocation10 [shape = 'u8[8192]{0}', space=vmem, size = 0x2000, scoped, tag = 'output window, operand 0']
    %9 = vsyncpa [#allocation6], 0
    %s10 = scalar_lea.sflag [#allocation6], 1
    %11 = vsyncpa %s10, 0
    %12 = vsyncpa [#allocation9], 0
    %13 = vsyncpa [#allocation7], 0
    %s14 = scalar_lea.sflag [#allocation7], 1
    %15 = vsyncpa %s14, 0
    loop: start=0, step=1, limit=4
    $region2: #{tpu_custom_call.1} parent=1 // loop_pre_header
      _
    $region3: #{tpu_custom_call.1} parent=1 // loop_header
      %s17 = sphi 0, %s21
      %p18 = scmp.ge.s32.totalorder %s17, 4
      %s24 = sphi 0, %s36
      %s25 = sphi 0, %s32
      %s26 = sphi 0, %s24
      %s27 = sphi 0, %s25
      %s28 = sphi 0, %s26
      %s29 = sphi 0, %s27
      %s39 = sphi 0, %s41
      %s42 = sphi 0, %s39
      %s43 = sphi 0, %s42
      %s59 = sphi 0, %s43
      %s65 = sphi 0, %s67
      %s68 = sphi 0, %s65
      %s69 = sphi 0, %s68
      %s85 = sphi 0, %s69
      %s89 = sphi 0, %s89
      %s91 = sphi 0, %s89
      %s92 = sphi 0, %s91
      %s106 = sphi 0, %s92
      %s110 = sphi 0, %s110
      %s112 = sphi 0, %s110
      %s113 = sphi 0, %s112
      %s127 = sphi 0, %s113
      %s135 = sphi 0, %s137
      %s138 = sphi 0, %s135
      %s139 = sphi 0, %s138
      %s155 = sphi 0, %s139
    $region4: #{tpu_custom_call.1} parent=1 // loop_header_branch
      %20 = sbr.rel (%p18) target = $region8
    $region5: #{tpu_custom_call.1} parent=1 // loop_body
      %s22 = ssub.s32 %s17, 1
      %s23 = ssub.s32 %s17, 2
      %s30 = sadd.s32 1, %s25
      %p31 = scmp.ge.s32.totalorder %s30, 1
      %s32 = scalar_select %p31, 0, %s30
      %s33 = sadd.s32 1, %s24
      %s34 = scalar_select %p31, %s33, %s24
      %p35 = scmp.ge.s32.totalorder %s34, 2
      %s36 = scalar_select %p35, 0, %s34
      %s37 = ssub.s32 %s24, %s36
      %p38 = scmp.eq.s32.totalorder %s37, 0
      %s40 = sadd.s32 %s39, 1
      %s41 = scalar_select %p38, %s39, %s40
      %p44 = pneg %p38
      %p45 = scmp.eq.s32.totalorder %s17, 1
      %p46 = por %p44, %p45
      %p47 = scmp.ne.s32.totalorder %s39, %s42
      %p48 = scmp.eq.s32.totalorder %s17, 0
      %p49 = por %p47, %p48
      %p50 = scmp.ne.s32.totalorder %s39, %s42
      %p51 = scmp.eq.s32.totalorder %s22, 1
      %p52 = por %p50, %p51
      %p53 = scmp.ne.s32.totalorder %s42, %s43
      %p54 = scmp.eq.s32.totalorder %s22, 0
      %p55 = por %p53, %p54
      %p56 = scmp.ne.s32.totalorder %s42, %s43
      %p57 = scmp.eq.s32.totalorder %s23, 1
      %p58 = por %p56, %p57
      %p60 = scmp.ne.s32.totalorder %s43, %s59
      %p61 = scmp.eq.s32.totalorder %s23, 0
      %p62 = por %p60, %p61
      %s63 = ssub.s32 %s24, %s36
      %p64 = scmp.eq.s32.totalorder %s63, 0
      %s66 = sadd.s32 %s65, 1
      %s67 = scalar_select %p64, %s65, %s66
      %p70 = pneg %p64
      %p71 = scmp.eq.s32.totalorder %s17, 1
      %p72 = por %p70, %p71
      %p73 = scmp.ne.s32.totalorder %s65, %s68
      %p74 = scmp.eq.s32.totalorder %s17, 0
      %p75 = por %p73, %p74
      %p76 = scmp.ne.s32.totalorder %s65, %s68
      %p77 = scmp.eq.s32.totalorder %s22, 1
      %p78 = por %p76, %p77
      %p79 = scmp.ne.s32.totalorder %s68, %s69
      %p80 = scmp.eq.s32.totalorder %s22, 0
      %p81 = por %p79, %p80
      %p82 = scmp.ne.s32.totalorder %s68, %s69
      %p83 = scmp.eq.s32.totalorder %s23, 1
      %p84 = por %p82, %p83
      %p86 = scmp.ne.s32.totalorder %s69, %s85
      %p87 = scmp.eq.s32.totalorder %s23, 0
      %p88 = por %p86, %p87
      %s90 = sadd.s32 %s89, 1
      %p93 = scmp.eq.s32.totalorder %s17, 1
      %p94 = scmp.ne.s32.totalorder %s89, %s91
      %p95 = scmp.eq.s32.totalorder %s17, 0
      %p96 = por %p94, %p95
      %p97 = scmp.ne.s32.totalorder %s89, %s91
      %p98 = scmp.eq.s32.totalorder %s22, 1
      %p99 = por %p97, %p98
      %p100 = scmp.ne.s32.totalorder %s91, %s92
      %p101 = scmp.eq.s32.totalorder %s22, 0
      %p102 = por %p100, %p101
      %p103 = scmp.ne.s32.totalorder %s91, %s92
      %p104 = scmp.eq.s32.totalorder %s23, 1
      %p105 = por %p103, %p104
      %p107 = scmp.ne.s32.totalorder %s92, %s106
      %p108 = scmp.eq.s32.totalorder %s23, 0
      %p109 = por %p107, %p108
      %s111 = sadd.s32 %s110, 1
      %p114 = scmp.eq.s32.totalorder %s17, 1
      %p115 = scmp.ne.s32.totalorder %s110, %s112
      %p116 = scmp.eq.s32.totalorder %s17, 0
      %p117 = por %p115, %p116
      %p118 = scmp.ne.s32.totalorder %s110, %s112
      %p119 = scmp.eq.s32.totalorder %s22, 1
      %p120 = por %p118, %p119
      %p121 = scmp.ne.s32.totalorder %s112, %s113
      %p122 = scmp.eq.s32.totalorder %s22, 0
      %p123 = por %p121, %p122
      %p124 = scmp.ne.s32.totalorder %s112, %s113
      %p125 = scmp.eq.s32.totalorder %s23, 1
      %p126 = por %p124, %p125
      %p128 = scmp.ne.s32.totalorder %s113, %s127
      %p129 = scmp.eq.s32.totalorder %s23, 0
      %p130 = por %p128, %p129
      %s131 = ssub.s32 %s24, %s36
      %s132 = ssub.s32 %s25, %s32
      %s133 = sor.u32 %s131, %s132
      %p134 = scmp.eq.s32.totalorder %s133, 0
      %s136 = sadd.s32 %s135, 1
      %s137 = scalar_select %p134, %s135, %s136
      %p140 = pneg %p134
      %p141 = scmp.eq.s32.totalorder %s17, 1
      %p142 = por %p140, %p141
      %p143 = scmp.ne.s32.totalorder %s135, %s138
      %p144 = scmp.eq.s32.totalorder %s17, 0
      %p145 = por %p143, %p144
      %p146 = scmp.ne.s32.totalorder %s135, %s138
      %p147 = scmp.eq.s32.totalorder %s22, 1
      %p148 = por %p146, %p147
      %p149 = scmp.ne.s32.totalorder %s138, %s139
      %p150 = scmp.eq.s32.totalorder %s22, 0
      %p151 = por %p149, %p150
      %p152 = scmp.ne.s32.totalorder %s138, %s139
      %p153 = scmp.eq.s32.totalorder %s23, 1
      %p154 = por %p152, %p153
      %p156 = scmp.ne.s32.totalorder %s139, %s155
      %p157 = scmp.eq.s32.totalorder %s23, 0
      %p158 = por %p156, %p157
      %p159 = scmp.le.s32.totalorder 1, %s17
      %p160 = scmp.lt.s32.totalorder %s17, 3
      %p161 = pnand %p159, %p160
      %p162 = pneg %p161
      // Predicated region
      $region9: #{tpu_custom_call.1} parent=5 // pred_check
        _
      $region10: #{tpu_custom_call.1} parent=5 // pred_check_branch
        %164 = sbr.rel (%p161) target = $region12
      $region11: #{tpu_custom_call.1} parent=5 // pred_region
        %s165 = ssub.s32 %s17, 1
        // Predicated region
        $region13: #{tpu_custom_call.1} parent=11 // pred_check
          %p166 = pneg %p102
        $region14: #{tpu_custom_call.1} parent=11 // pred_check_branch
          %168 = sbr.rel (%p166) target = $region16
        $region15: #{tpu_custom_call.1} parent=11 // pred_region
          %s170 = ssub.s32 512, 512
          %171 = vsyncadd [#allocation9], %s170
          %s172 = sshll.u32 [#allocation8], 4
          %s173 = int_to_ptr.vmem [resolvable:$true] %s172
          %178 = dma.hbm_to_vmem [thread:$0]  %s2, 512, %s173, [#allocation9], 128, 128, 8
        $region16: #{tpu_custom_call.1} parent=11 // pred_fallthru
          _
        // Predicated region
        $region17: #{tpu_custom_call.1} parent=11 // pred_check
          %p179 = pneg %p123
        $region18: #{tpu_custom_call.1} parent=11 // pred_check_branch
          %181 = sbr.rel (%p179) target = $region20
        $region19: #{tpu_custom_call.1} parent=11 // pred_region
          _
        $region20: #{tpu_custom_call.1} parent=11 // pred_fallthru
          _
      $region12: #{tpu_custom_call.1} parent=5 // pred_fallthru
        _
      %p182 = scmp.lt.s32.totalorder %s17, 2
      // Predicated region
      $region21: #{tpu_custom_call.1} parent=5 // pred_check
        %p183 = pneg %p182
      $region22: #{tpu_custom_call.1} parent=5 // pred_check_branch
        %185 = sbr.rel (%p183) target = $region24
      $region23: #{tpu_custom_call.1} parent=5 // pred_region
        // Predicated region
        $region25: #{tpu_custom_call.1} parent=23 // pred_check
          %p186 = pneg %p49
        $region26: #{tpu_custom_call.1} parent=23 // pred_check_branch
          %188 = sbr.rel (%p186) target = $region28
        $region27: #{tpu_custom_call.1} parent=23 // pred_region
          %s189 = sand.u32 %s39, 1
          %s190 = scalar_lea.sflag [#allocation6], %s189
          %s191 = sand.u32 %s39, 1
          %s192 = smul.addr %s191, 8
          %s193 = scalar_lea.vmem [#allocation5], %s192
          %s195 = ssub.s32 128, 128
          %196 = vsyncadd %s190, %s195
          %s197 = smul.addr %s24, 128
          %s198 = scalar_lea.hbm %s0, %s197
          %s200 = sshll.u32 %s193, 4
          %s201 = int_to_ptr.vmem [resolvable:$true] %s200
          %203 = dma.hbm_to_vmem [thread:$0]  %s198, 128, %s201, %s190
        $region28: #{tpu_custom_call.1} parent=23 // pred_fallthru
          _
        // Predicated region
        $region29: #{tpu_custom_call.1} parent=23 // pred_check
          %p204 = pneg %p75
        $region30: #{tpu_custom_call.1} parent=23 // pred_check_branch
          %206 = sbr.rel (%p204) target = $region32
        $region31: #{tpu_custom_call.1} parent=23 // pred_region
          %p207 = scmp.lt.s32.totalorder %s24, 1
          %s208 = scalar_select %p207, %s24, 1
          %s209 = scalar_lea.vmem %s1, %s208
        $region32: #{tpu_custom_call.1} parent=23 // pred_fallthru
          _
      $region24: #{tpu_custom_call.1} parent=5 // pred_fallthru
        _
      %p210 = scmp.le.s32.totalorder 1, %s17
      %p211 = scmp.lt.s32.totalorder %s17, 3
      %p212 = pnand %p210, %p211
      %p213 = pneg %p212
      // Predicated region
      $region33: #{tpu_custom_call.1} parent=5 // pred_check
        _
      $region34: #{tpu_custom_call.1} parent=5 // pred_check_branch
        %215 = sbr.rel (%p212) target = $region36
      $region35: #{tpu_custom_call.1} parent=5 // pred_region
        %s216 = ssub.s32 %s17, 1
        %s217 = sand.u32 %s42, 1
        %s218 = scalar_lea.sflag [#allocation6], %s217
        %s219 = sand.u32 %s42, 1
        %s220 = smul.addr %s219, 8
        %s221 = scalar_lea.vmem [#allocation5], %s220
        // Predicated region
        $region37: #{tpu_custom_call.1} parent=35 // pred_check
          %p222 = pneg %p55
        $region38: #{tpu_custom_call.1} parent=35 // pred_check_branch
          %224 = sbr.rel (%p222) target = $region40
        $region39: #{tpu_custom_call.1} parent=35 // pred_region
          %225 = dma.done %s218, 128
        $region40: #{tpu_custom_call.1} parent=35 // pred_fallthru
          _
        // Predicated region
        $region41: #{tpu_custom_call.1} parent=35 // pred_check
          %p226 = pneg %p102
        $region42: #{tpu_custom_call.1} parent=35 // pred_check_branch
          %228 = sbr.rel (%p226) target = $region44
        $region43: #{tpu_custom_call.1} parent=35 // pred_region
          %229 = dma.done [#allocation9], 512
        $region44: #{tpu_custom_call.1} parent=35 // pred_fallthru
          _
        %s230 = sand.u32 %s42, 1
        %s231 = scalar_lea.sflag [#allocation6], %s230
        %s232 = sand.u32 %s42, 1
        %s233 = smul.addr %s232, 8
        %s234 = scalar_lea.vmem [#allocation5], %s233
        %p235 = pneg %p55
        %p236 = pneg %p52
        %p237 = scmp.lt.s32.totalorder %s26, 1
        %s238 = scalar_select %p237, %s26, 1
        %s239 = scalar_lea.vmem %s1, %s238
        %p240 = pneg %p81
        %p241 = pneg %p78
        %p242 = pneg %p102
        %p243 = pneg %p99
        %p244 = pneg %p123
        %p245 = pneg %p120
        %p246 = pneg %p151
        %p247 = pneg %p148
        %s248 = sand.u32 %s138, 1
        %s249 = scalar_lea.sflag [#allocation7], %s248
        %s250 = sand.u32 %s138, 1
        %s251 = smul.addr %s250, 8
        %s252 = scalar_lea.vmem [#allocation10], %s251
        %p253 = scmp.lt.s32.totalorder %s26, 1
        %s254 = scalar_select %p253, %s26, 1
        %s255 = scalar_lea.vmem %s1, %s254
        %p256 = scmp.eq.s32.totalorder %s27, 0
        // Predicated region
        $region45: #{tpu_custom_call.1} parent=35 // pred_check
          %p257 = pneg %p256
        $region46: #{tpu_custom_call.1} parent=35 // pred_check_branch
          %259 = sbr.rel (%p257) target = $region48
        $region47: #{tpu_custom_call.1} parent=35 // pred_region
          %v260 = vld [vmem:[%s221] sm:$0xff]
          %v261 = vld [vmem:[#allocation8] sm:$0xff]
          %v262 = vld [vmem:[#allocation8 + $0x8] sm:$0xff]
          %v263 = vld [vmem:[#allocation8 + $0x10] sm:$0xff]
          %v264 = vld [vmem:[#allocation8 + $0x18] sm:$0xff]
          %v265 = vld [vmem:[%s3] sm:$0x1]
          %v267 = vlaneseq
          %v268 = vshrl.u32 %v267, 7
          %v269 = vsub.s32 0, %v268
          %v270 = vrot.slane %v265, %v269
          %vm272 = vcmask 261120
          %v274 = vsel %vm272, %v260, 0
          %276 = vmatprep.subr.mxu0 0.0
          %277 = vmatpush1.msra.mxu0 %v261
          %278 = vmatprep.subr.mxu0 0.0
          %279 = vmatpush1.msra.mxu0 %v262
          %280 = vmatprep.subr.mxu0 0.0
          %281 = vmatpush1.msra.mxu0 %v263
          %282 = vmatprep.subr.mxu0 0.0
          %283 = vmatpush1.msra.mxu0 %v264
          %284 = vmatprep.subr.mxu0 0.0
          %285 = vmatpush1.msra.mxu0 0.0
          %286 = vmatprep.subr.mxu0 0.0
          %287 = vmatpush1.msra.mxu0 0.0
          %288 = vmatprep.subr.mxu0 0.0
          %289 = vmatpush1.msra.mxu0 0.0
          %290 = vmatprep.subr.mxu0 0.0
          %291 = vmatpush1.msra.mxu0 0.0
          %292 = vmatprep.subr.mxu0 0.0
          %293 = vmatpush1.msra.mxu0 0.0
          %294 = vmatprep.subr.mxu0 0.0
          %295 = vmatpush1.msra.mxu0 0.0
          %296 = vmatprep.subr.mxu0 0.0
          %297 = vmatpush1.msra.mxu0 0.0
          %298 = vmatprep.subr.mxu0 0.0
          %299 = vmatpush1.msra.mxu0 0.0
          %300 = vmatprep.subr.mxu0 0.0
          %301 = vmatpush1.msra.mxu0 0.0
          %302 = vmatprep.subr.mxu0 0.0
          %303 = vmatpush1.msra.mxu0 0.0
          %304 = vmatprep.subr.mxu0 0.0
          %305 = vmatpush1.msra.mxu0 0.0
          %306 = vmatprep.subr.mxu0 0.0
          %307 = vmatpush1.msra.mxu0 0.0
          %308 = vmatprep.subr.mxu0 0.0
          %309 = vmatpush1.msra.mxu0 0.0
          %310 = vmatprep.subr.mxu0 0.0
          %311 = vmatpush1.msra.mxu0 0.0
          %312 = vmatprep.subr.mxu0 0.0
          %313 = vmatpush1.msra.mxu0 0.0
          %314 = vmatprep.subr.mxu0 0.0
          %315 = vmatpush1.msra.mxu0 0.0
          %316 = vmatprep.subr.mxu0 0.0
          %317 = vmatpush1.msra.mxu0 0.0
          %318 = vmatprep.subr.mxu0 0.0
          %319 = vmatpush1.msra.mxu0 0.0
          %320 = vmatprep.subr.mxu0 0.0
          %321 = vmatpush1.msra.mxu0 0.0
          %322 = vmatprep.subr.mxu0 0.0
          %323 = vmatpush1.msra.mxu0 0.0
          %324 = vmatprep.subr.mxu0 0.0
          %325 = vmatpush1.msra.mxu0 0.0
          %326 = vmatprep.subr.mxu0 0.0
          %327 = vmatpush1.msra.mxu0 0.0
          %328 = vmatprep.subr.mxu0 0.0
          %329 = vmatpush1.msra.mxu0 0.0
          %330 = vmatprep.subr.mxu0 0.0
          %331 = vmatpush1.msra.mxu0 0.0
          %332 = vmatprep.subr.mxu0 0.0
          %333 = vmatpush1.msra.mxu0 0.0
          %334 = vmatprep.subr.mxu0 0.0
          %335 = vmatpush1.msra.mxu0 0.0
          %336 = vmatprep.subr.mxu0 0.0
          %337 = vmatpush1.msra.mxu0 0.0
          %338 = vmatprep.subr.mxu0 0.0
          %339 = vmatpush1.msra.mxu0 0.0
          %340 = vmatprep.mubr.f32.mxu0 0.0
          %341 = vmatmul.mubr.f32.gmra.mrb[0].mxu0 %v274
          %v342 = vpop.f32.mrb[0].mxu0
          %v343 = vadd.f32 %v270, %v342
          %v344 = vpop.f32.mrb[0].mxu0
          %345 = vdwg.mxu0
          %347 = vrot.lane.b32.xlu0 %v343, 120
          %v348 = vpop.permute.xlu0 %347
          %350 = vrot.lane.b32.xlu0 %v343, 112
          %v351 = vpop.permute.xlu0 %350
          %353 = vrot.lane.b32.xlu0 %v343, 104
          %v354 = vpop.permute.xlu0 %353
          %v356 = vcombine.low %v343, %v351
          %v357 = vcombine.high %v343, %v351
          %v359 = vunpack.c.l.s4 1983009808
          %v360 = vunpack.c.0.s8 %v359
          %v361 = vlaneseq
          %v362 = vshrl.u32 %v361, 7
          %v363 = vsub.s32 %v360, %v362
          %v364 = vrot.slane %v356, %v363
          %v366 = vunpack.c.l.s4 1983009808
          %v367 = vunpack.c.0.s8 %v366
          %v368 = vlaneseq
          %v369 = vshrl.u32 %v368, 7
          %v370 = vsub.s32 %v367, %v369
          %v371 = vrot.slane %v357, %v370
          %v372 = vcombine.low %v348, %v354
          %v373 = vcombine.high %v348, %v354
          %v375 = vunpack.c.l.s4 1983009808
          %v376 = vunpack.c.0.s8 %v375
          %v377 = vlaneseq
          %v378 = vshrl.u32 %v377, 7
          %v379 = vsub.s32 %v376, %v378
          %v380 = vrot.slane %v372, %v379
          %v382 = vunpack.c.l.s4 1983009808
          %v383 = vunpack.c.0.s8 %v382
          %v384 = vlaneseq
          %v385 = vshrl.u32 %v384, 7
          %v386 = vsub.s32 %v383, %v385
          %v387 = vrot.slane %v373, %v386
          %v388 = vcombine.low %v364, %v380
          %v389 = vcombine.high %v364, %v380
          %v391 = vunpack.c.l.s4 1934713408
          %v392 = vunpack.c.0.s8 %v391
          %v393 = vlaneseq
          %v394 = vshrl.u32 %v393, 7
          %v395 = vsub.s32 %v392, %v394
          %v396 = vrot.slane %v388, %v395
          %v398 = vunpack.c.l.s4 1934713408
          %v399 = vunpack.c.0.s8 %v398
          %v400 = vlaneseq
          %v401 = vshrl.u32 %v400, 7
          %v402 = vsub.s32 %v399, %v401
          %v403 = vrot.slane %v389, %v402
          %v404 = vcombine.low %v371, %v387
          %v405 = vcombine.high %v371, %v387
          %v407 = vunpack.c.l.s4 1934713408
          %v408 = vunpack.c.0.s8 %v407
          %v409 = vlaneseq
          %v410 = vshrl.u32 %v409, 7
          %v411 = vsub.s32 %v408, %v410
          %v412 = vrot.slane %v404, %v411
          %v414 = vunpack.c.l.s4 1934713408
          %v415 = vunpack.c.0.s8 %v414
          %v416 = vlaneseq
          %v417 = vshrl.u32 %v416, 7
          %v418 = vsub.s32 %v415, %v417
          %v419 = vrot.slane %v405, %v418
          %v420 = vcombine.high %v396, 0.0
          %v421 = vcombine.high %v403, 0.0
          %v422 = vcombine.high %v412, 0.0
          %v423 = vcombine.high %v419, 0.0
          %v424 = vcombine.low %v396, %v403
          %v426 = vunpack.c.l.s4 1983009808
          %v427 = vunpack.c.0.s8 %v426
          %v428 = vlaneseq
          %v429 = vshrl.u32 %v428, 7
          %v430 = vsub.s32 %v427, %v429
          %v431 = vrot.slane %v424, %v430
          %v432 = vcombine.low %v420, %v421
          %v434 = vunpack.c.l.s4 1983009808
          %v435 = vunpack.c.0.s8 %v434
          %v436 = vlaneseq
          %v437 = vshrl.u32 %v436, 7
          %v438 = vsub.s32 %v435, %v437
          %v439 = vrot.slane %v432, %v438
          %v440 = vcombine.low %v412, %v419
          %v442 = vunpack.c.l.s4 1983009808
          %v443 = vunpack.c.0.s8 %v442
          %v444 = vlaneseq
          %v445 = vshrl.u32 %v444, 7
          %v446 = vsub.s32 %v443, %v445
          %v447 = vrot.slane %v440, %v446
          %v448 = vcombine.low %v422, %v423
          %v450 = vunpack.c.l.s4 1983009808
          %v451 = vunpack.c.0.s8 %v450
          %v452 = vlaneseq
          %v453 = vshrl.u32 %v452, 7
          %v454 = vsub.s32 %v451, %v453
          %v455 = vrot.slane %v448, %v454
          %v456 = vcombine.low %v431, %v439
          %v457 = vcombine.high %v431, %v439
          %v459 = vunpack.c.l.s4 1934713408
          %v460 = vunpack.c.0.s8 %v459
          %v461 = vlaneseq
          %v462 = vshrl.u32 %v461, 7
          %v463 = vsub.s32 %v460, %v462
          %v464 = vrot.slane %v456, %v463
          %v466 = vunpack.c.l.s4 1934713408
          %v467 = vunpack.c.0.s8 %v466
          %v468 = vlaneseq
          %v469 = vshrl.u32 %v468, 7
          %v470 = vsub.s32 %v467, %v469
          %v471 = vrot.slane %v457, %v470
          %v472 = vcombine.low %v447, %v455
          %v473 = vcombine.high %v447, %v455
          %v475 = vunpack.c.l.s4 1934713408
          %v476 = vunpack.c.0.s8 %v475
          %v477 = vlaneseq
          %v478 = vshrl.u32 %v477, 7
          %v479 = vsub.s32 %v476, %v478
          %v480 = vrot.slane %v472, %v479
          %v482 = vunpack.c.l.s4 1934713408
          %v483 = vunpack.c.0.s8 %v482
          %v484 = vlaneseq
          %v485 = vshrl.u32 %v484, 7
          %v486 = vsub.s32 %v483, %v485
          %v487 = vrot.slane %v473, %v486
          %v488 = vcombine.low %v464, %v480
          %v489 = vcombine.high %v464, %v480
          %v490 = vcombine.low %v471, %v487
          %v491 = vcombine.high %v471, %v487
          %vm492 = vcmask 64512
          %493 = vst.msk [vmem:[#allocation2] sm:$0xff] %vm492, %v488
          %494 = vst.msk [vmem:[#allocation2 + $0x8] sm:$0xff] %vm492, %v489
          %495 = vst.msk [vmem:[#allocation2 + $0x10] sm:$0xff] %vm492, %v490
          %496 = vst.msk [vmem:[#allocation2 + $0x18] sm:$0xff] %vm492, %v491
          %497 = vrot.lane.b32.xlu0 %v343, 96
          %v498 = vpop.permute.xlu0 %497
          %499 = vrot.lane.b32.xlu0 %v348, 96
          %v500 = vpop.permute.xlu0 %499
          %501 = vrot.lane.b32.xlu0 %v351, 96
          %v502 = vpop.permute.xlu0 %501
          %503 = vrot.lane.b32.xlu0 %v354, 96
          %v504 = vpop.permute.xlu0 %503
          %v509 = vcombine.low %v498, %v502
          %v510 = vcombine.high %v498, %v502
          %v512 = vunpack.c.l.s4 1983009808
          %v513 = vunpack.c.0.s8 %v512
          %v514 = vlaneseq
          %v515 = vshrl.u32 %v514, 7
          %v516 = vsub.s32 %v513, %v515
          %v517 = vrot.slane %v509, %v516
          %v519 = vunpack.c.l.s4 1983009808
          %v520 = vunpack.c.0.s8 %v519
          %v521 = vlaneseq
          %v522 = vshrl.u32 %v521, 7
          %v523 = vsub.s32 %v520, %v522
          %v524 = vrot.slane %v510, %v523
          %v525 = vcombine.low %v500, %v504
          %v526 = vcombine.high %v500, %v504
          %v528 = vunpack.c.l.s4 1983009808
          %v529 = vunpack.c.0.s8 %v528
          %v530 = vlaneseq
          %v531 = vshrl.u32 %v530, 7
          %v532 = vsub.s32 %v529, %v531
          %v533 = vrot.slane %v525, %v532
          %v535 = vunpack.c.l.s4 1983009808
          %v536 = vunpack.c.0.s8 %v535
          %v537 = vlaneseq
          %v538 = vshrl.u32 %v537, 7
          %v539 = vsub.s32 %v536, %v538
          %v540 = vrot.slane %v526, %v539
          %v541 = vcombine.low %v517, %v533
          %v542 = vcombine.high %v517, %v533
          %v544 = vunpack.c.l.s4 1934713408
          %v545 = vunpack.c.0.s8 %v544
          %v546 = vlaneseq
          %v547 = vshrl.u32 %v546, 7
          %v548 = vsub.s32 %v545, %v547
          %v549 = vrot.slane %v541, %v548
          %v551 = vunpack.c.l.s4 1934713408
          %v552 = vunpack.c.0.s8 %v551
          %v553 = vlaneseq
          %v554 = vshrl.u32 %v553, 7
          %v555 = vsub.s32 %v552, %v554
          %v556 = vrot.slane %v542, %v555
          %v557 = vcombine.low %v524, %v540
          %v558 = vcombine.high %v524, %v540
          %v560 = vunpack.c.l.s4 1934713408
          %v561 = vunpack.c.0.s8 %v560
          %v562 = vlaneseq
          %v563 = vshrl.u32 %v562, 7
          %v564 = vsub.s32 %v561, %v563
          %v565 = vrot.slane %v557, %v564
          %v567 = vunpack.c.l.s4 1934713408
          %v568 = vunpack.c.0.s8 %v567
          %v569 = vlaneseq
          %v570 = vshrl.u32 %v569, 7
          %v571 = vsub.s32 %v568, %v570
          %v572 = vrot.slane %v558, %v571
          %v573 = vcombine.high %v549, 0.0
          %v574 = vcombine.high %v556, 0.0
          %v575 = vcombine.high %v565, 0.0
          %v576 = vcombine.high %v572, 0.0
          %v577 = vcombine.low %v549, %v556
          %v579 = vunpack.c.l.s4 1983009808
          %v580 = vunpack.c.0.s8 %v579
          %v581 = vlaneseq
          %v582 = vshrl.u32 %v581, 7
          %v583 = vsub.s32 %v580, %v582
          %v584 = vrot.slane %v577, %v583
          %v585 = vcombine.low %v573, %v574
          %v587 = vunpack.c.l.s4 1983009808
          %v588 = vunpack.c.0.s8 %v587
          %v589 = vlaneseq
          %v590 = vshrl.u32 %v589, 7
          %v591 = vsub.s32 %v588, %v590
          %v592 = vrot.slane %v585, %v591
          %v593 = vcombine.low %v565, %v572
          %v595 = vunpack.c.l.s4 1983009808
          %v596 = vunpack.c.0.s8 %v595
          %v597 = vlaneseq
          %v598 = vshrl.u32 %v597, 7
          %v599 = vsub.s32 %v596, %v598
          %v600 = vrot.slane %v593, %v599
          %v601 = vcombine.low %v575, %v576
          %v603 = vunpack.c.l.s4 1983009808
          %v604 = vunpack.c.0.s8 %v603
          %v605 = vlaneseq
          %v606 = vshrl.u32 %v605, 7
          %v607 = vsub.s32 %v604, %v606
          %v608 = vrot.slane %v601, %v607
          %v609 = vcombine.low %v584, %v592
          %v610 = vcombine.high %v584, %v592
          %v612 = vunpack.c.l.s4 1934713408
          %v613 = vunpack.c.0.s8 %v612
          %v614 = vlaneseq
          %v615 = vshrl.u32 %v614, 7
          %v616 = vsub.s32 %v613, %v615
          %v617 = vrot.slane %v609, %v616
          %v619 = vunpack.c.l.s4 1934713408
          %v620 = vunpack.c.0.s8 %v619
          %v621 = vlaneseq
          %v622 = vshrl.u32 %v621, 7
          %v623 = vsub.s32 %v620, %v622
          %v624 = vrot.slane %v610, %v623
          %v625 = vcombine.low %v600, %v608
          %v626 = vcombine.high %v600, %v608
          %v628 = vunpack.c.l.s4 1934713408
          %v629 = vunpack.c.0.s8 %v628
          %v630 = vlaneseq
          %v631 = vshrl.u32 %v630, 7
          %v632 = vsub.s32 %v629, %v631
          %v633 = vrot.slane %v625, %v632
          %v635 = vunpack.c.l.s4 1934713408
          %v636 = vunpack.c.0.s8 %v635
          %v637 = vlaneseq
          %v638 = vshrl.u32 %v637, 7
          %v639 = vsub.s32 %v636, %v638
          %v640 = vrot.slane %v626, %v639
          %v641 = vcombine.low %v617, %v633
          %v642 = vcombine.high %v617, %v633
          %v643 = vcombine.low %v624, %v640
          %v644 = vcombine.high %v624, %v640
          %645 = vst.msk [vmem:[#allocation3] sm:$0xff] %vm492, %v641
          %646 = vst.msk [vmem:[#allocation3 + $0x8] sm:$0xff] %vm492, %v642
          %647 = vst.msk [vmem:[#allocation3 + $0x10] sm:$0xff] %vm492, %v643
          %648 = vst.msk [vmem:[#allocation3 + $0x18] sm:$0xff] %vm492, %v644
          %649 = vrot.lane.b32.xlu0 %v343, 64
          %v650 = vpop.permute.xlu0 %649
          %651 = vrot.lane.b32.xlu0 %v348, 64
          %v652 = vpop.permute.xlu0 %651
          %653 = vrot.lane.b32.xlu0 %v351, 64
          %v654 = vpop.permute.xlu0 %653
          %655 = vrot.lane.b32.xlu0 %v354, 64
          %v656 = vpop.permute.xlu0 %655
          %v661 = vcombine.low %v650, %v654
          %v662 = vcombine.high %v650, %v654
          %v664 = vunpack.c.l.s4 1983009808
          %v665 = vunpack.c.0.s8 %v664
          %v666 = vlaneseq
          %v667 = vshrl.u32 %v666, 7
          %v668 = vsub.s32 %v665, %v667
          %v669 = vrot.slane %v661, %v668
          %v671 = vunpack.c.l.s4 1983009808
          %v672 = vunpack.c.0.s8 %v671
          %v673 = vlaneseq
          %v674 = vshrl.u32 %v673, 7
          %v675 = vsub.s32 %v672, %v674
          %v676 = vrot.slane %v662, %v675
          %v677 = vcombine.low %v652, %v656
          %v678 = vcombine.high %v652, %v656
          %v680 = vunpack.c.l.s4 1983009808
          %v681 = vunpack.c.0.s8 %v680
          %v682 = vlaneseq
          %v683 = vshrl.u32 %v682, 7
          %v684 = vsub.s32 %v681, %v683
          %v685 = vrot.slane %v677, %v684
          %v687 = vunpack.c.l.s4 1983009808
          %v688 = vunpack.c.0.s8 %v687
          %v689 = vlaneseq
          %v690 = vshrl.u32 %v689, 7
          %v691 = vsub.s32 %v688, %v690
          %v692 = vrot.slane %v678, %v691
          %v693 = vcombine.low %v669, %v685
          %v694 = vcombine.high %v669, %v685
          %v696 = vunpack.c.l.s4 1934713408
          %v697 = vunpack.c.0.s8 %v696
          %v698 = vlaneseq
          %v699 = vshrl.u32 %v698, 7
          %v700 = vsub.s32 %v697, %v699
          %v701 = vrot.slane %v693, %v700
          %v703 = vunpack.c.l.s4 1934713408
          %v704 = vunpack.c.0.s8 %v703
          %v705 = vlaneseq
          %v706 = vshrl.u32 %v705, 7
          %v707 = vsub.s32 %v704, %v706
          %v708 = vrot.slane %v694, %v707
          %v709 = vcombine.low %v676, %v692
          %v710 = vcombine.high %v676, %v692
          %v712 = vunpack.c.l.s4 1934713408
          %v713 = vunpack.c.0.s8 %v712
          %v714 = vlaneseq
          %v715 = vshrl.u32 %v714, 7
          %v716 = vsub.s32 %v713, %v715
          %v717 = vrot.slane %v709, %v716
          %v719 = vunpack.c.l.s4 1934713408
          %v720 = vunpack.c.0.s8 %v719
          %v721 = vlaneseq
          %v722 = vshrl.u32 %v721, 7
          %v723 = vsub.s32 %v720, %v722
          %v724 = vrot.slane %v710, %v723
          %v725 = vcombine.high %v701, 0.0
          %v726 = vcombine.high %v708, 0.0
          %v727 = vcombine.high %v717, 0.0
          %v728 = vcombine.high %v724, 0.0
          %v729 = vcombine.low %v701, %v708
          %v731 = vunpack.c.l.s4 1983009808
          %v732 = vunpack.c.0.s8 %v731
          %v733 = vlaneseq
          %v734 = vshrl.u32 %v733, 7
          %v735 = vsub.s32 %v732, %v734
          %v736 = vrot.slane %v729, %v735
          %v737 = vcombine.low %v725, %v726
          %v739 = vunpack.c.l.s4 1983009808
          %v740 = vunpack.c.0.s8 %v739
          %v741 = vlaneseq
          %v742 = vshrl.u32 %v741, 7
          %v743 = vsub.s32 %v740, %v742
          %v744 = vrot.slane %v737, %v743
          %v745 = vcombine.low %v717, %v724
          %v747 = vunpack.c.l.s4 1983009808
          %v748 = vunpack.c.0.s8 %v747
          %v749 = vlaneseq
          %v750 = vshrl.u32 %v749, 7
          %v751 = vsub.s32 %v748, %v750
          %v752 = vrot.slane %v745, %v751
          %v753 = vcombine.low %v727, %v728
          %v755 = vunpack.c.l.s4 1983009808
          %v756 = vunpack.c.0.s8 %v755
          %v757 = vlaneseq
          %v758 = vshrl.u32 %v757, 7
          %v759 = vsub.s32 %v756, %v758
          %v760 = vrot.slane %v753, %v759
          %v761 = vcombine.low %v736, %v744
          %v762 = vcombine.high %v736, %v744
          %v764 = vunpack.c.l.s4 1934713408
          %v765 = vunpack.c.0.s8 %v764
          %v766 = vlaneseq
          %v767 = vshrl.u32 %v766, 7
          %v768 = vsub.s32 %v765, %v767
          %v769 = vrot.slane %v761, %v768
          %v771 = vunpack.c.l.s4 1934713408
          %v772 = vunpack.c.0.s8 %v771
          %v773 = vlaneseq
          %v774 = vshrl.u32 %v773, 7
          %v775 = vsub.s32 %v772, %v774
          %v776 = vrot.slane %v762, %v775
          %v777 = vcombine.low %v752, %v760
          %v778 = vcombine.high %v752, %v760
          %v780 = vunpack.c.l.s4 1934713408
          %v781 = vunpack.c.0.s8 %v780
          %v782 = vlaneseq
          %v783 = vshrl.u32 %v782, 7
          %v784 = vsub.s32 %v781, %v783
          %v785 = vrot.slane %v777, %v784
          %v787 = vunpack.c.l.s4 1934713408
          %v788 = vunpack.c.0.s8 %v787
          %v789 = vlaneseq
          %v790 = vshrl.u32 %v789, 7
          %v791 = vsub.s32 %v788, %v790
          %v792 = vrot.slane %v778, %v791
          %v793 = vcombine.low %v769, %v785
          %v794 = vcombine.high %v769, %v785
          %v795 = vcombine.low %v776, %v792
          %v796 = vcombine.high %v776, %v792
          %797 = vst.msk [vmem:[#allocation4] sm:$0xff] %vm492, %v793
          %798 = vst.msk [vmem:[#allocation4 + $0x8] sm:$0xff] %vm492, %v794
          %799 = vst.msk [vmem:[#allocation4 + $0x10] sm:$0xff] %vm492, %v795
          %800 = vst.msk [vmem:[#allocation4 + $0x18] sm:$0xff] %vm492, %v796
        $region48: #{tpu_custom_call.1} parent=35 // pred_fallthru
          _
        %v801 = vld [vmem:[%s255] sm:$0x1]
        %s802 = smul.u32 %s27, 8
        %s803 = scalar_lea.vmem [#allocation2], %s802
        %v804 = vld [vmem:[%s803] sm:$0xff]
        %v805 = vld [vmem:[%s803 + $0x8] sm:$0xff]
        %v806 = vld [vmem:[%s803 + $0x10] sm:$0xff]
        %v807 = vld [vmem:[%s803 + $0x18] sm:$0xff]
        %v808 = vld [vmem:[#allocation3] sm:$0xff]
        %v809 = vld [vmem:[#allocation3 + $0x8] sm:$0xff]
        %v810 = vld [vmem:[#allocation3 + $0x10] sm:$0xff]
        %v811 = vld [vmem:[#allocation3 + $0x18] sm:$0xff]
        %v813 = vlaneseq
        %v814 = vshrl.u32 %v813, 7
        %v815 = vsub.s32 0, %v814
        %v816 = vrot.slane %v801, %v815
        %vm818 = vcmask 64512
        %v820 = vsel %vm818, %v804, 0
        %v823 = vsel %vm818, %v808, 0
        %825 = vmatprep.subr.mxu0 0.0
        %826 = vmatpush1.xpose.msra.mxu0 %v823
        %827 = vmatprep.subr.mxu0 0.0
        %828 = vmatpush1.xpose.msra.mxu0 0.0
        %829 = vmatprep.subr.mxu0 0.0
        %830 = vmatpush1.xpose.msra.mxu0 0.0
        %831 = vmatprep.subr.mxu0 0.0
        %832 = vmatpush1.xpose.msra.mxu0 0.0
        %833 = vmatprep.subr.mxu0 0.0
        %834 = vmatpush1.xpose.msra.mxu0 0.0
        %835 = vmatprep.subr.mxu0 0.0
        %836 = vmatpush1.xpose.msra.mxu0 0.0
        %837 = vmatprep.subr.mxu0 0.0
        %838 = vmatpush1.xpose.msra.mxu0 0.0
        %839 = vmatprep.subr.mxu0 0.0
        %840 = vmatpush1.xpose.msra.mxu0 0.0
        %841 = vmatprep.subr.mxu0 0.0
        %842 = vmatpush1.xpose.msra.mxu0 0.0
        %843 = vmatprep.subr.mxu0 0.0
        %844 = vmatpush1.xpose.msra.mxu0 0.0
        %845 = vmatprep.subr.mxu0 0.0
        %846 = vmatpush1.xpose.msra.mxu0 0.0
        %847 = vmatprep.subr.mxu0 0.0
        %848 = vmatpush1.xpose.msra.mxu0 0.0
        %849 = vmatprep.subr.mxu0 0.0
        %850 = vmatpush1.xpose.msra.mxu0 0.0
        %851 = vmatprep.subr.mxu0 0.0
        %852 = vmatpush1.xpose.msra.mxu0 0.0
        %853 = vmatprep.subr.mxu0 0.0
        %854 = vmatpush1.xpose.msra.mxu0 0.0
        %855 = vmatprep.subr.mxu0 0.0
        %856 = vmatpush1.xpose.msra.mxu0 0.0
        %857 = vmatprep.subr.mxu0 0.0
        %858 = vmatpush1.xpose.msra.mxu0 0.0
        %859 = vmatprep.subr.mxu0 0.0
        %860 = vmatpush1.xpose.msra.mxu0 0.0
        %861 = vmatprep.subr.mxu0 0.0
        %862 = vmatpush1.xpose.msra.mxu0 0.0
        %863 = vmatprep.subr.mxu0 0.0
        %864 = vmatpush1.xpose.msra.mxu0 0.0
        %865 = vmatprep.subr.mxu0 0.0
        %866 = vmatpush1.xpose.msra.mxu0 0.0
        %867 = vmatprep.subr.mxu0 0.0
        %868 = vmatpush1.xpose.msra.mxu0 0.0
        %869 = vmatprep.subr.mxu0 0.0
        %870 = vmatpush1.xpose.msra.mxu0 0.0
        %871 = vmatprep.subr.mxu0 0.0
        %872 = vmatpush1.xpose.msra.mxu0 0.0
        %873 = vmatprep.subr.mxu0 0.0
        %874 = vmatpush1.xpose.msra.mxu0 0.0
        %875 = vmatprep.subr.mxu0 0.0
        %876 = vmatpush1.xpose.msra.mxu0 0.0
        %877 = vmatprep.subr.mxu0 0.0
        %878 = vmatpush1.xpose.msra.mxu0 0.0
        %879 = vmatprep.subr.mxu0 0.0
        %880 = vmatpush1.xpose.msra.mxu0 0.0
        %881 = vmatprep.subr.mxu0 0.0
        %882 = vmatpush1.xpose.msra.mxu0 0.0
        %883 = vmatprep.subr.mxu0 0.0
        %884 = vmatpush1.xpose.msra.mxu0 0.0
        %885 = vmatprep.subr.mxu0 0.0
        %886 = vmatpush1.xpose.msra.mxu0 0.0
        %887 = vmatprep.subr.mxu0 0.0
        %888 = vmatpush1.xpose.msra.mxu0 0.0
        %889 = vmatprep.mubr.f32.mxu0 0.0
        %890 = vmatmul.mubr.f32.gmra.mrb[0].mxu0 %v820
        %v891 = vpop.f32.mrb[0].mxu0
        %v892 = vadd.f32 %v816, %v891
        %v893 = vpop.f32.mrb[0].mxu0
        %894 = vdwg.mxu0
        %v896 = vsel %vm818, %v805, 0
        %v899 = vsel %vm818, %v809, 0
        %901 = vmatprep.subr.mxu0 0.0
        %902 = vmatpush1.xpose.msra.mxu0 %v899
        %903 = vmatprep.subr.mxu0 0.0
        %904 = vmatpush1.xpose.msra.mxu0 0.0
        %905 = vmatprep.subr.mxu0 0.0
        %906 = vmatpush1.xpose.msra.mxu0 0.0
        %907 = vmatprep.subr.mxu0 0.0
        %908 = vmatpush1.xpose.msra.mxu0 0.0
        %909 = vmatprep.subr.mxu0 0.0
        %910 = vmatpush1.xpose.msra.mxu0 0.0
        %911 = vmatprep.subr.mxu0 0.0
        %912 = vmatpush1.xpose.msra.mxu0 0.0
        %913 = vmatprep.subr.mxu0 0.0
        %914 = vmatpush1.xpose.msra.mxu0 0.0
        %915 = vmatprep.subr.mxu0 0.0
        %916 = vmatpush1.xpose.msra.mxu0 0.0
        %917 = vmatprep.subr.mxu0 0.0
        %918 = vmatpush1.xpose.msra.mxu0 0.0
        %919 = vmatprep.subr.mxu0 0.0
        %920 = vmatpush1.xpose.msra.mxu0 0.0
        %921 = vmatprep.subr.mxu0 0.0
        %922 = vmatpush1.xpose.msra.mxu0 0.0
        %923 = vmatprep.subr.mxu0 0.0
        %924 = vmatpush1.xpose.msra.mxu0 0.0
        %925 = vmatprep.subr.mxu0 0.0
        %926 = vmatpush1.xpose.msra.mxu0 0.0
        %927 = vmatprep.subr.mxu0 0.0
        %928 = vmatpush1.xpose.msra.mxu0 0.0
        %929 = vmatprep.subr.mxu0 0.0
        %930 = vmatpush1.xpose.msra.mxu0 0.0
        %931 = vmatprep.subr.mxu0 0.0
        %932 = vmatpush1.xpose.msra.mxu0 0.0
        %933 = vmatprep.subr.mxu0 0.0
        %934 = vmatpush1.xpose.msra.mxu0 0.0
        %935 = vmatprep.subr.mxu0 0.0
        %936 = vmatpush1.xpose.msra.mxu0 0.0
        %937 = vmatprep.subr.mxu0 0.0
        %938 = vmatpush1.xpose.msra.mxu0 0.0
        %939 = vmatprep.subr.mxu0 0.0
        %940 = vmatpush1.xpose.msra.mxu0 0.0
        %941 = vmatprep.subr.mxu0 0.0
        %942 = vmatpush1.xpose.msra.mxu0 0.0
        %943 = vmatprep.subr.mxu0 0.0
        %944 = vmatpush1.xpose.msra.mxu0 0.0
        %945 = vmatprep.subr.mxu0 0.0
        %946 = vmatpush1.xpose.msra.mxu0 0.0
        %947 = vmatprep.subr.mxu0 0.0
        %948 = vmatpush1.xpose.msra.mxu0 0.0
        %949 = vmatprep.subr.mxu0 0.0
        %950 = vmatpush1.xpose.msra.mxu0 0.0
        %951 = vmatprep.subr.mxu0 0.0
        %952 = vmatpush1.xpose.msra.mxu0 0.0
        %953 = vmatprep.subr.mxu0 0.0
        %954 = vmatpush1.xpose.msra.mxu0 0.0
        %955 = vmatprep.subr.mxu0 0.0
        %956 = vmatpush1.xpose.msra.mxu0 0.0
        %957 = vmatprep.subr.mxu0 0.0
        %958 = vmatpush1.xpose.msra.mxu0 0.0
        %959 = vmatprep.subr.mxu0 0.0
        %960 = vmatpush1.xpose.msra.mxu0 0.0
        %961 = vmatprep.subr.mxu0 0.0
        %962 = vmatpush1.xpose.msra.mxu0 0.0
        %963 = vmatprep.subr.mxu0 0.0
        %964 = vmatpush1.xpose.msra.mxu0 0.0
        %965 = vmatprep.mubr.f32.mxu0 0.0
        %966 = vmatmul.mubr.f32.gmra.mrb[0].mxu0 %v896
        %v967 = vpop.f32.mrb[0].mxu0
        %v968 = vadd.f32 %v816, %v967
        %v969 = vpop.f32.mrb[0].mxu0
        %970 = vdwg.mxu0
        %v972 = vsel %vm818, %v806, 0
        %v975 = vsel %vm818, %v810, 0
        %977 = vmatprep.subr.mxu0 0.0
        %978 = vmatpush1.xpose.msra.mxu0 %v975
        %979 = vmatprep.subr.mxu0 0.0
        %980 = vmatpush1.xpose.msra.mxu0 0.0
        %981 = vmatprep.subr.mxu0 0.0
        %982 = vmatpush1.xpose.msra.mxu0 0.0
        %983 = vmatprep.subr.mxu0 0.0
        %984 = vmatpush1.xpose.msra.mxu0 0.0
        %985 = vmatprep.subr.mxu0 0.0
        %986 = vmatpush1.xpose.msra.mxu0 0.0
        %987 = vmatprep.subr.mxu0 0.0
        %988 = vmatpush1.xpose.msra.mxu0 0.0
        %989 = vmatprep.subr.mxu0 0.0
        %990 = vmatpush1.xpose.msra.mxu0 0.0
        %991 = vmatprep.subr.mxu0 0.0
        %992 = vmatpush1.xpose.msra.mxu0 0.0
        %993 = vmatprep.subr.mxu0 0.0
        %994 = vmatpush1.xpose.msra.mxu0 0.0
        %995 = vmatprep.subr.mxu0 0.0
        %996 = vmatpush1.xpose.msra.mxu0 0.0
        %997 = vmatprep.subr.mxu0 0.0
        %998 = vmatpush1.xpose.msra.mxu0 0.0
        %999 = vmatprep.subr.mxu0 0.0
        %1000 = vmatpush1.xpose.msra.mxu0 0.0
        %1001 = vmatprep.subr.mxu0 0.0
        %1002 = vmatpush1.xpose.msra.mxu0 0.0
        %1003 = vmatprep.subr.mxu0 0.0
        %1004 = vmatpush1.xpose.msra.mxu0 0.0
        %1005 = vmatprep.subr.mxu0 0.0
        %1006 = vmatpush1.xpose.msra.mxu0 0.0
        %1007 = vmatprep.subr.mxu0 0.0
        %1008 = vmatpush1.xpose.msra.mxu0 0.0
        %1009 = vmatprep.subr.mxu0 0.0
        %1010 = vmatpush1.xpose.msra.mxu0 0.0
        %1011 = vmatprep.subr.mxu0 0.0
        %1012 = vmatpush1.xpose.msra.mxu0 0.0
        %1013 = vmatprep.subr.mxu0 0.0
        %1014 = vmatpush1.xpose.msra.mxu0 0.0
        %1015 = vmatprep.subr.mxu0 0.0
        %1016 = vmatpush1.xpose.msra.mxu0 0.0
        %1017 = vmatprep.subr.mxu0 0.0
        %1018 = vmatpush1.xpose.msra.mxu0 0.0
        %1019 = vmatprep.subr.mxu0 0.0
        %1020 = vmatpush1.xpose.msra.mxu0 0.0
        %1021 = vmatprep.subr.mxu0 0.0
        %1022 = vmatpush1.xpose.msra.mxu0 0.0
        %1023 = vmatprep.subr.mxu0 0.0
        %1024 = vmatpush1.xpose.msra.mxu0 0.0
        %1025 = vmatprep.subr.mxu0 0.0
        %1026 = vmatpush1.xpose.msra.mxu0 0.0
        %1027 = vmatprep.subr.mxu0 0.0
        %1028 = vmatpush1.xpose.msra.mxu0 0.0
        %1029 = vmatprep.subr.mxu0 0.0
        %1030 = vmatpush1.xpose.msra.mxu0 0.0
        %1031 = vmatprep.subr.mxu0 0.0
        %1032 = vmatpush1.xpose.msra.mxu0 0.0
        %1033 = vmatprep.subr.mxu0 0.0
        %1034 = vmatpush1.xpose.msra.mxu0 0.0
        %1035 = vmatprep.subr.mxu0 0.0
        %1036 = vmatpush1.xpose.msra.mxu0 0.0
        %1037 = vmatprep.subr.mxu0 0.0
        %1038 = vmatpush1.xpose.msra.mxu0 0.0
        %1039 = vmatprep.subr.mxu0 0.0
        %1040 = vmatpush1.xpose.msra.mxu0 0.0
        %1041 = vmatprep.mubr.f32.mxu0 0.0
        %1042 = vmatmul.mubr.f32.gmra.mrb[0].mxu0 %v972
        %v1043 = vpop.f32.mrb[0].mxu0
        %v1044 = vadd.f32 %v816, %v1043
        %v1045 = vpop.f32.mrb[0].mxu0
        %1046 = vdwg.mxu0
        %v1048 = vsel %vm818, %v807, 0
        %v1051 = vsel %vm818, %v811, 0
        %1053 = vmatprep.subr.mxu0 0.0
        %1054 = vmatpush1.xpose.msra.mxu0 %v1051
        %1055 = vmatprep.subr.mxu0 0.0
        %1056 = vmatpush1.xpose.msra.mxu0 0.0
        %1057 = vmatprep.subr.mxu0 0.0
        %1058 = vmatpush1.xpose.msra.mxu0 0.0
        %1059 = vmatprep.subr.mxu0 0.0
        %1060 = vmatpush1.xpose.msra.mxu0 0.0
        %1061 = vmatprep.subr.mxu0 0.0
        %1062 = vmatpush1.xpose.msra.mxu0 0.0
        %1063 = vmatprep.subr.mxu0 0.0
        %1064 = vmatpush1.xpose.msra.mxu0 0.0
        %1065 = vmatprep.subr.mxu0 0.0
        %1066 = vmatpush1.xpose.msra.mxu0 0.0
        %1067 = vmatprep.subr.mxu0 0.0
        %1068 = vmatpush1.xpose.msra.mxu0 0.0
        %1069 = vmatprep.subr.mxu0 0.0
        %1070 = vmatpush1.xpose.msra.mxu0 0.0
        %1071 = vmatprep.subr.mxu0 0.0
        %1072 = vmatpush1.xpose.msra.mxu0 0.0
        %1073 = vmatprep.subr.mxu0 0.0
        %1074 = vmatpush1.xpose.msra.mxu0 0.0
        %1075 = vmatprep.subr.mxu0 0.0
        %1076 = vmatpush1.xpose.msra.mxu0 0.0
        %1077 = vmatprep.subr.mxu0 0.0
        %1078 = vmatpush1.xpose.msra.mxu0 0.0
        %1079 = vmatprep.subr.mxu0 0.0
        %1080 = vmatpush1.xpose.msra.mxu0 0.0
        %1081 = vmatprep.subr.mxu0 0.0
        %1082 = vmatpush1.xpose.msra.mxu0 0.0
        %1083 = vmatprep.subr.mxu0 0.0
        %1084 = vmatpush1.xpose.msra.mxu0 0.0
        %1085 = vmatprep.subr.mxu0 0.0
        %1086 = vmatpush1.xpose.msra.mxu0 0.0
        %1087 = vmatprep.subr.mxu0 0.0
        %1088 = vmatpush1.xpose.msra.mxu0 0.0
        %1089 = vmatprep.subr.mxu0 0.0
        %1090 = vmatpush1.xpose.msra.mxu0 0.0
        %1091 = vmatprep.subr.mxu0 0.0
        %1092 = vmatpush1.xpose.msra.mxu0 0.0
        %1093 = vmatprep.subr.mxu0 0.0
        %1094 = vmatpush1.xpose.msra.mxu0 0.0
        %1095 = vmatprep.subr.mxu0 0.0
        %1096 = vmatpush1.xpose.msra.mxu0 0.0
        %1097 = vmatprep.subr.mxu0 0.0
        %1098 = vmatpush1.xpose.msra.mxu0 0.0
        %1099 = vmatprep.subr.mxu0 0.0
        %1100 = vmatpush1.xpose.msra.mxu0 0.0
        %1101 = vmatprep.subr.mxu0 0.0
        %1102 = vmatpush1.xpose.msra.mxu0 0.0
        %1103 = vmatprep.subr.mxu0 0.0
        %1104 = vmatpush1.xpose.msra.mxu0 0.0
        %1105 = vmatprep.subr.mxu0 0.0
        %1106 = vmatpush1.xpose.msra.mxu0 0.0
        %1107 = vmatprep.subr.mxu0 0.0
        %1108 = vmatpush1.xpose.msra.mxu0 0.0
        %1109 = vmatprep.subr.mxu0 0.0
        %1110 = vmatpush1.xpose.msra.mxu0 0.0
        %1111 = vmatprep.subr.mxu0 0.0
        %1112 = vmatpush1.xpose.msra.mxu0 0.0
        %1113 = vmatprep.subr.mxu0 0.0
        %1114 = vmatpush1.xpose.msra.mxu0 0.0
        %1115 = vmatprep.subr.mxu0 0.0
        %1116 = vmatpush1.xpose.msra.mxu0 0.0
        %1117 = vmatprep.mubr.f32.mxu0 0.0
        %1118 = vmatmul.mubr.f32.gmra.mrb[0].mxu0 %v1048
        %v1119 = vpop.f32.mrb[0].mxu0
        %v1120 = vadd.f32 %v816, %v1119
        %v1121 = vpop.f32.mrb[0].mxu0
        %1122 = vdwg.mxu0
        %v1123 = vsel %vm818, %v892, -inf
        %1124 = vmax.xlane.f32.xlu0 %v1123
        %v1125 = vpop.xlane.xlu0 %1124
        %v1126 = vsel %vm818, %v968, -inf
        %1127 = vmax.xlane.f32.xlu0 %v1126
        %v1128 = vpop.xlane.xlu0 %1127
        %v1129 = vsel %vm818, %v1044, -inf
        %1130 = vmax.xlane.f32.xlu0 %v1129
        %v1131 = vpop.xlane.xlu0 %1130
        %v1132 = vsel %vm818, %v1120, -inf
        %1133 = vmax.xlane.f32.xlu0 %v1132
        %v1134 = vpop.xlane.xlu0 %1133
        %v1135 = vsub.f32 %v892, %v1125
        %v1136 = vsub.f32 %v968, %v1128
        %v1137 = vsub.f32 %v1044, %v1131
        %v1138 = vsub.f32 %v1120, %v1134
        %v1139 = vmul.f32 %v1135, 1.442695
        %v1140 = vpow.pop %v1139
        %v1141 = vmul.f32 %v1136, 1.442695
        %v1142 = vpow.pop %v1141
        %v1143 = vmul.f32 %v1137, 1.442695
        %v1144 = vpow.pop %v1143
        %v1145 = vmul.f32 %v1138, 1.442695
        %v1146 = vpow.pop %v1145
        %v1147 = vsel %vm818, %v1140, 0.0
        %1148 = vadd.xlane.f32.xlu0 %v1147
        %v1149 = vpop.xlane.xlu0 %1148
        %v1150 = vsel %vm818, %v1142, 0.0
        %1151 = vadd.xlane.f32.xlu0 %v1150
        %v1152 = vpop.xlane.xlu0 %1151
        %v1153 = vsel %vm818, %v1144, 0.0
        %1154 = vadd.xlane.f32.xlu0 %v1153
        %v1155 = vpop.xlane.xlu0 %1154
        %v1156 = vsel %vm818, %v1146, 0.0
        %1157 = vadd.xlane.f32.xlu0 %v1156
        %v1158 = vpop.xlane.xlu0 %1157
        %v1159 = vld [vmem:[#allocation4] sm:$0xff]
        %v1160 = vld [vmem:[#allocation4 + $0x8] sm:$0xff]
        %v1161 = vld [vmem:[#allocation4 + $0x10] sm:$0xff]
        %v1162 = vld [vmem:[#allocation4 + $0x18] sm:$0xff]
        %v1164 = vsel %vm818, %v1140, 0
        %1166 = vmatprep.subr.mxu0 0.0
        %1167 = vmatpush1.msra.mxu0 %v1159
        %1168 = vmatprep.subr.mxu0 0.0
        %1169 = vmatpush1.msra.mxu0 0.0
        %1170 = vmatprep.subr.mxu0 0.0
        %1171 = vmatpush1.msra.mxu0 0.0
        %1172 = vmatprep.subr.mxu0 0.0
        %1173 = vmatpush1.msra.mxu0 0.0
        %1174 = vmatprep.subr.mxu0 0.0
        %1175 = vmatpush1.msra.mxu0 0.0
        %1176 = vmatprep.subr.mxu0 0.0
        %1177 = vmatpush1.msra.mxu0 0.0
        %1178 = vmatprep.subr.mxu0 0.0
        %1179 = vmatpush1.msra.mxu0 0.0
        %1180 = vmatprep.subr.mxu0 0.0
        %1181 = vmatpush1.msra.mxu0 0.0
        %1182 = vmatprep.subr.mxu0 0.0
        %1183 = vmatpush1.msra.mxu0 0.0
        %1184 = vmatprep.subr.mxu0 0.0
        %1185 = vmatpush1.msra.mxu0 0.0
        %1186 = vmatprep.subr.mxu0 0.0
        %1187 = vmatpush1.msra.mxu0 0.0
        %1188 = vmatprep.subr.mxu0 0.0
        %1189 = vmatpush1.msra.mxu0 0.0
        %1190 = vmatprep.subr.mxu0 0.0
        %1191 = vmatpush1.msra.mxu0 0.0
        %1192 = vmatprep.subr.mxu0 0.0
        %1193 = vmatpush1.msra.mxu0 0.0
        %1194 = vmatprep.subr.mxu0 0.0
        %1195 = vmatpush1.msra.mxu0 0.0
        %1196 = vmatprep.subr.mxu0 0.0
        %1197 = vmatpush1.msra.mxu0 0.0
        %1198 = vmatprep.subr.mxu0 0.0
        %1199 = vmatpush1.msra.mxu0 0.0
        %1200 = vmatprep.subr.mxu0 0.0
        %1201 = vmatpush1.msra.mxu0 0.0
        %1202 = vmatprep.subr.mxu0 0.0
        %1203 = vmatpush1.msra.mxu0 0.0
        %1204 = vmatprep.subr.mxu0 0.0
        %1205 = vmatpush1.msra.mxu0 0.0
        %1206 = vmatprep.subr.mxu0 0.0
        %1207 = vmatpush1.msra.mxu0 0.0
        %1208 = vmatprep.subr.mxu0 0.0
        %1209 = vmatpush1.msra.mxu0 0.0
        %1210 = vmatprep.subr.mxu0 0.0
        %1211 = vmatpush1.msra.mxu0 0.0
        %1212 = vmatprep.subr.mxu0 0.0
        %1213 = vmatpush1.msra.mxu0 0.0
        %1214 = vmatprep.subr.mxu0 0.0
        %1215 = vmatpush1.msra.mxu0 0.0
        %1216 = vmatprep.subr.mxu0 0.0
        %1217 = vmatpush1.msra.mxu0 0.0
        %1218 = vmatprep.subr.mxu0 0.0
        %1219 = vmatpush1.msra.mxu0 0.0
        %1220 = vmatprep.subr.mxu0 0.0
        %1221 = vmatpush1.msra.mxu0 0.0
        %1222 = vmatprep.subr.mxu0 0.0
        %1223 = vmatpush1.msra.mxu0 0.0
        %1224 = vmatprep.subr.mxu0 0.0
        %1225 = vmatpush1.msra.mxu0 0.0
        %1226 = vmatprep.subr.mxu0 0.0
        %1227 = vmatpush1.msra.mxu0 0.0
        %1228 = vmatprep.subr.mxu0 0.0
        %1229 = vmatpush1.msra.mxu0 0.0
        %1230 = vmatprep.mubr.f32.mxu0 0.0
        %1231 = vmatmul.mubr.f32.gmra.mrb[0].mxu0 %v1164
        %v1232 = vpop.f32.mrb[0].mxu0
        %v1233 = vadd.f32 0.0, %v1232
        %v1234 = vpop.f32.mrb[0].mxu0
        %1235 = vdwg.mxu0
        %v1237 = vsel %vm818, %v1142, 0
        %1239 = vmatprep.subr.mxu0 0.0
        %1240 = vmatpush1.msra.mxu0 %v1160
        %1241 = vmatprep.subr.mxu0 0.0
        %1242 = vmatpush1.msra.mxu0 0.0
        %1243 = vmatprep.subr.mxu0 0.0
        %1244 = vmatpush1.msra.mxu0 0.0
        %1245 = vmatprep.subr.mxu0 0.0
        %1246 = vmatpush1.msra.mxu0 0.0
        %1247 = vmatprep.subr.mxu0 0.0
        %1248 = vmatpush1.msra.mxu0 0.0
        %1249 = vmatprep.subr.mxu0 0.0
        %1250 = vmatpush1.msra.mxu0 0.0
        %1251 = vmatprep.subr.mxu0 0.0
        %1252 = vmatpush1.msra.mxu0 0.0
        %1253 = vmatprep.subr.mxu0 0.0
        %1254 = vmatpush1.msra.mxu0 0.0
        %1255 = vmatprep.subr.mxu0 0.0
        %1256 = vmatpush1.msra.mxu0 0.0
        %1257 = vmatprep.subr.mxu0 0.0
        %1258 = vmatpush1.msra.mxu0 0.0
        %1259 = vmatprep.subr.mxu0 0.0
        %1260 = vmatpush1.msra.mxu0 0.0
        %1261 = vmatprep.subr.mxu0 0.0
        %1262 = vmatpush1.msra.mxu0 0.0
        %1263 = vmatprep.subr.mxu0 0.0
        %1264 = vmatpush1.msra.mxu0 0.0
        %1265 = vmatprep.subr.mxu0 0.0
        %1266 = vmatpush1.msra.mxu0 0.0
        %1267 = vmatprep.subr.mxu0 0.0
        %1268 = vmatpush1.msra.mxu0 0.0
        %1269 = vmatprep.subr.mxu0 0.0
        %1270 = vmatpush1.msra.mxu0 0.0
        %1271 = vmatprep.subr.mxu0 0.0
        %1272 = vmatpush1.msra.mxu0 0.0
        %1273 = vmatprep.subr.mxu0 0.0
        %1274 = vmatpush1.msra.mxu0 0.0
        %1275 = vmatprep.subr.mxu0 0.0
        %1276 = vmatpush1.msra.mxu0 0.0
        %1277 = vmatprep.subr.mxu0 0.0
        %1278 = vmatpush1.msra.mxu0 0.0
        %1279 = vmatprep.subr.mxu0 0.0
        %1280 = vmatpush1.msra.mxu0 0.0
        %1281 = vmatprep.subr.mxu0 0.0
        %1282 = vmatpush1.msra.mxu0 0.0
        %1283 = vmatprep.subr.mxu0 0.0
        %1284 = vmatpush1.msra.mxu0 0.0
        %1285 = vmatprep.subr.mxu0 0.0
        %1286 = vmatpush1.msra.mxu0 0.0
        %1287 = vmatprep.subr.mxu0 0.0
        %1288 = vmatpush1.msra.mxu0 0.0
        %1289 = vmatprep.subr.mxu0 0.0
        %1290 = vmatpush1.msra.mxu0 0.0
        %1291 = vmatprep.subr.mxu0 0.0
        %1292 = vmatpush1.msra.mxu0 0.0
        %1293 = vmatprep.subr.mxu0 0.0
        %1294 = vmatpush1.msra.mxu0 0.0
        %1295 = vmatprep.subr.mxu0 0.0
        %1296 = vmatpush1.msra.mxu0 0.0
        %1297 = vmatprep.subr.mxu0 0.0
        %1298 = vmatpush1.msra.mxu0 0.0
        %1299 = vmatprep.subr.mxu0 0.0
        %1300 = vmatpush1.msra.mxu0 0.0
        %1301 = vmatprep.subr.mxu0 0.0
        %1302 = vmatpush1.msra.mxu0 0.0
        %1303 = vmatprep.mubr.f32.mxu0 0.0
        %1304 = vmatmul.mubr.f32.gmra.mrb[0].mxu0 %v1237
        %v1305 = vpop.f32.mrb[0].mxu0
        %v1306 = vadd.f32 0.0, %v1305
        %v1307 = vpop.f32.mrb[0].mxu0
        %1308 = vdwg.mxu0
        %v1310 = vsel %vm818, %v1144, 0
        %1312 = vmatprep.subr.mxu0 0.0
        %1313 = vmatpush1.msra.mxu0 %v1161
        %1314 = vmatprep.subr.mxu0 0.0
        %1315 = vmatpush1.msra.mxu0 0.0
        %1316 = vmatprep.subr.mxu0 0.0
        %1317 = vmatpush1.msra.mxu0 0.0
        %1318 = vmatprep.subr.mxu0 0.0
        %1319 = vmatpush1.msra.mxu0 0.0
        %1320 = vmatprep.subr.mxu0 0.0
        %1321 = vmatpush1.msra.mxu0 0.0
        %1322 = vmatprep.subr.mxu0 0.0
        %1323 = vmatpush1.msra.mxu0 0.0
        %1324 = vmatprep.subr.mxu0 0.0
        %1325 = vmatpush1.msra.mxu0 0.0
        %1326 = vmatprep.subr.mxu0 0.0
        %1327 = vmatpush1.msra.mxu0 0.0
        %1328 = vmatprep.subr.mxu0 0.0
        %1329 = vmatpush1.msra.mxu0 0.0
        %1330 = vmatprep.subr.mxu0 0.0
        %1331 = vmatpush1.msra.mxu0 0.0
        %1332 = vmatprep.subr.mxu0 0.0
        %1333 = vmatpush1.msra.mxu0 0.0
        %1334 = vmatprep.subr.mxu0 0.0
        %1335 = vmatpush1.msra.mxu0 0.0
        %1336 = vmatprep.subr.mxu0 0.0
        %1337 = vmatpush1.msra.mxu0 0.0
        %1338 = vmatprep.subr.mxu0 0.0
        %1339 = vmatpush1.msra.mxu0 0.0
        %1340 = vmatprep.subr.mxu0 0.0
        %1341 = vmatpush1.msra.mxu0 0.0
        %1342 = vmatprep.subr.mxu0 0.0
        %1343 = vmatpush1.msra.mxu0 0.0
        %1344 = vmatprep.subr.mxu0 0.0
        %1345 = vmatpush1.msra.mxu0 0.0
        %1346 = vmatprep.subr.mxu0 0.0
        %1347 = vmatpush1.msra.mxu0 0.0
        %1348 = vmatprep.subr.mxu0 0.0
        %1349 = vmatpush1.msra.mxu0 0.0
        %1350 = vmatprep.subr.mxu0 0.0
        %1351 = vmatpush1.msra.mxu0 0.0
        %1352 = vmatprep.subr.mxu0 0.0
        %1353 = vmatpush1.msra.mxu0 0.0
        %1354 = vmatprep.subr.mxu0 0.0
        %1355 = vmatpush1.msra.mxu0 0.0
        %1356 = vmatprep.subr.mxu0 0.0
        %1357 = vmatpush1.msra.mxu0 0.0
        %1358 = vmatprep.subr.mxu0 0.0
        %1359 = vmatpush1.msra.mxu0 0.0
        %1360 = vmatprep.subr.mxu0 0.0
        %1361 = vmatpush1.msra.mxu0 0.0
        %1362 = vmatprep.subr.mxu0 0.0
        %1363 = vmatpush1.msra.mxu0 0.0
        %1364 = vmatprep.subr.mxu0 0.0
        %1365 = vmatpush1.msra.mxu0 0.0
        %1366 = vmatprep.subr.mxu0 0.0
        %1367 = vmatpush1.msra.mxu0 0.0
        %1368 = vmatprep.subr.mxu0 0.0
        %1369 = vmatpush1.msra.mxu0 0.0
        %1370 = vmatprep.subr.mxu0 0.0
        %1371 = vmatpush1.msra.mxu0 0.0
        %1372 = vmatprep.subr.mxu0 0.0
        %1373 = vmatpush1.msra.mxu0 0.0
        %1374 = vmatprep.subr.mxu0 0.0
        %1375 = vmatpush1.msra.mxu0 0.0
        %1376 = vmatprep.mubr.f32.mxu0 0.0
        %1377 = vmatmul.mubr.f32.gmra.mrb[0].mxu0 %v1310
        %v1378 = vpop.f32.mrb[0].mxu0
        %v1379 = vadd.f32 0.0, %v1378
        %v1380 = vpop.f32.mrb[0].mxu0
        %1381 = vdwg.mxu0
        %v1383 = vsel %vm818, %v1146, 0
        %1385 = vmatprep.subr.mxu0 0.0
        %1386 = vmatpush1.msra.mxu0 %v1162
        %1387 = vmatprep.subr.mxu0 0.0
        %1388 = vmatpush1.msra.mxu0 0.0
        %1389 = vmatprep.subr.mxu0 0.0
        %1390 = vmatpush1.msra.mxu0 0.0
        %1391 = vmatprep.subr.mxu0 0.0
        %1392 = vmatpush1.msra.mxu0 0.0
        %1393 = vmatprep.subr.mxu0 0.0
        %1394 = vmatpush1.msra.mxu0 0.0
        %1395 = vmatprep.subr.mxu0 0.0
        %1396 = vmatpush1.msra.mxu0 0.0
        %1397 = vmatprep.subr.mxu0 0.0
        %1398 = vmatpush1.msra.mxu0 0.0
        %1399 = vmatprep.subr.mxu0 0.0
        %1400 = vmatpush1.msra.mxu0 0.0
        %1401 = vmatprep.subr.mxu0 0.0
        %1402 = vmatpush1.msra.mxu0 0.0
        %1403 = vmatprep.subr.mxu0 0.0
        %1404 = vmatpush1.msra.mxu0 0.0
        %1405 = vmatprep.subr.mxu0 0.0
        %1406 = vmatpush1.msra.mxu0 0.0
        %1407 = vmatprep.subr.mxu0 0.0
        %1408 = vmatpush1.msra.mxu0 0.0
        %1409 = vmatprep.subr.mxu0 0.0
        %1410 = vmatpush1.msra.mxu0 0.0
        %1411 = vmatprep.subr.mxu0 0.0
        %1412 = vmatpush1.msra.mxu0 0.0
        %1413 = vmatprep.subr.mxu0 0.0
        %1414 = vmatpush1.msra.mxu0 0.0
        %1415 = vmatprep.subr.mxu0 0.0
        %1416 = vmatpush1.msra.mxu0 0.0
        %1417 = vmatprep.subr.mxu0 0.0
        %1418 = vmatpush1.msra.mxu0 0.0
        %1419 = vmatprep.subr.mxu0 0.0
        %1420 = vmatpush1.msra.mxu0 0.0
        %1421 = vmatprep.subr.mxu0 0.0
        %1422 = vmatpush1.msra.mxu0 0.0
        %1423 = vmatprep.subr.mxu0 0.0
        %1424 = vmatpush1.msra.mxu0 0.0
        %1425 = vmatprep.subr.mxu0 0.0
        %1426 = vmatpush1.msra.mxu0 0.0
        %1427 = vmatprep.subr.mxu0 0.0
        %1428 = vmatpush1.msra.mxu0 0.0
        %1429 = vmatprep.subr.mxu0 0.0
        %1430 = vmatpush1.msra.mxu0 0.0
        %1431 = vmatprep.subr.mxu0 0.0
        %1432 = vmatpush1.msra.mxu0 0.0
        %1433 = vmatprep.subr.mxu0 0.0
        %1434 = vmatpush1.msra.mxu0 0.0
        %1435 = vmatprep.subr.mxu0 0.0
        %1436 = vmatpush1.msra.mxu0 0.0
        %1437 = vmatprep.subr.mxu0 0.0
        %1438 = vmatpush1.msra.mxu0 0.0
        %1439 = vmatprep.subr.mxu0 0.0
        %1440 = vmatpush1.msra.mxu0 0.0
        %1441 = vmatprep.subr.mxu0 0.0
        %1442 = vmatpush1.msra.mxu0 0.0
        %1443 = vmatprep.subr.mxu0 0.0
        %1444 = vmatpush1.msra.mxu0 0.0
        %1445 = vmatprep.subr.mxu0 0.0
        %1446 = vmatpush1.msra.mxu0 0.0
        %1447 = vmatprep.subr.mxu0 0.0
        %1448 = vmatpush1.msra.mxu0 0.0
        %1449 = vmatprep.mubr.f32.mxu0 0.0
        %1450 = vmatmul.mubr.f32.gmra.mrb[0].mxu0 %v1383
        %v1451 = vpop.f32.mrb[0].mxu0
        %v1452 = vadd.f32 0.0, %v1451
        %v1453 = vpop.f32.mrb[0].mxu0
        %1454 = vdwg.mxu0
        %v1455 = vrcp.pop %v1149
        %v1456 = vrcp.pop %v1152
        %v1457 = vrcp.pop %v1155
        %v1458 = vrcp.pop %v1158
        %v1459 = vmul.f32 %v1233, %v1455
        %v1460 = vmul.f32 %v1306, %v1456
        %v1461 = vmul.f32 %v1379, %v1457
        %v1462 = vmul.f32 %v1452, %v1458
        %v1463 = vcombine.low %v1459, %v1461
        %v1464 = vcombine.high %v1459, %v1461
        %v1466 = vunpack.c.l.s4 1983009808
        %v1467 = vunpack.c.0.s8 %v1466
        %v1468 = vlaneseq
        %v1469 = vshrl.u32 %v1468, 7
        %v1470 = vsub.s32 %v1467, %v1469
        %v1471 = vrot.slane %v1463, %v1470
        %v1473 = vunpack.c.l.s4 1983009808
        %v1474 = vunpack.c.0.s8 %v1473
        %v1475 = vlaneseq
        %v1476 = vshrl.u32 %v1475, 7
        %v1477 = vsub.s32 %v1474, %v1476
        %v1478 = vrot.slane %v1464, %v1477
        %v1479 = vcombine.low %v1460, %v1462
        %v1480 = vcombine.high %v1460, %v1462
        %v1482 = vunpack.c.l.s4 1983009808
        %v1483 = vunpack.c.0.s8 %v1482
        %v1484 = vlaneseq
        %v1485 = vshrl.u32 %v1484, 7
        %v1486 = vsub.s32 %v1483, %v1485
        %v1487 = vrot.slane %v1479, %v1486
        %v1489 = vunpack.c.l.s4 1983009808
        %v1490 = vunpack.c.0.s8 %v1489
        %v1491 = vlaneseq
        %v1492 = vshrl.u32 %v1491, 7
        %v1493 = vsub.s32 %v1490, %v1492
        %v1494 = vrot.slane %v1480, %v1493
        %v1495 = vcombine.low %v1471, %v1487
        %v1496 = vcombine.high %v1471, %v1487
        %v1498 = vunpack.c.l.s4 1934713408
        %v1499 = vunpack.c.0.s8 %v1498
        %v1500 = vlaneseq
        %v1501 = vshrl.u32 %v1500, 7
        %v1502 = vsub.s32 %v1499, %v1501
        %v1503 = vrot.slane %v1495, %v1502
        %v1505 = vunpack.c.l.s4 1934713408
        %v1506 = vunpack.c.0.s8 %v1505
        %v1507 = vlaneseq
        %v1508 = vshrl.u32 %v1507, 7
        %v1509 = vsub.s32 %v1506, %v1508
        %v1510 = vrot.slane %v1496, %v1509
        %v1511 = vcombine.low %v1478, %v1494
        %v1512 = vcombine.high %v1478, %v1494
        %v1514 = vunpack.c.l.s4 1934713408
        %v1515 = vunpack.c.0.s8 %v1514
        %v1516 = vlaneseq
        %v1517 = vshrl.u32 %v1516, 7
        %v1518 = vsub.s32 %v1515, %v1517
        %v1519 = vrot.slane %v1511, %v1518
        %v1521 = vunpack.c.l.s4 1934713408
        %v1522 = vunpack.c.0.s8 %v1521
        %v1523 = vlaneseq
        %v1524 = vshrl.u32 %v1523, 7
        %v1525 = vsub.s32 %v1522, %v1524
        %v1526 = vrot.slane %v1512, %v1525
        %v1527 = vcombine.high %v1503, 0.0
        %v1528 = vcombine.high %v1510, 0.0
        %v1529 = vcombine.high %v1519, 0.0
        %v1530 = vcombine.high %v1526, 0.0
        %v1531 = vcombine.low %v1503, %v1510
        %v1533 = vunpack.c.l.s4 1983009808
        %v1534 = vunpack.c.0.s8 %v1533
        %v1535 = vlaneseq
        %v1536 = vshrl.u32 %v1535, 7
        %v1537 = vsub.s32 %v1534, %v1536
        %v1538 = vrot.slane %v1531, %v1537
        %v1539 = vcombine.low %v1527, %v1528
        %v1541 = vunpack.c.l.s4 1983009808
        %v1542 = vunpack.c.0.s8 %v1541
        %v1543 = vlaneseq
        %v1544 = vshrl.u32 %v1543, 7
        %v1545 = vsub.s32 %v1542, %v1544
        %v1546 = vrot.slane %v1539, %v1545
        %v1547 = vcombine.low %v1519, %v1526
        %v1549 = vunpack.c.l.s4 1983009808
        %v1550 = vunpack.c.0.s8 %v1549
        %v1551 = vlaneseq
        %v1552 = vshrl.u32 %v1551, 7
        %v1553 = vsub.s32 %v1550, %v1552
        %v1554 = vrot.slane %v1547, %v1553
        %v1555 = vcombine.low %v1529, %v1530
        %v1557 = vunpack.c.l.s4 1983009808
        %v1558 = vunpack.c.0.s8 %v1557
        %v1559 = vlaneseq
        %v1560 = vshrl.u32 %v1559, 7
        %v1561 = vsub.s32 %v1558, %v1560
        %v1562 = vrot.slane %v1555, %v1561
        %v1563 = vcombine.low %v1538, %v1546
        %v1564 = vcombine.high %v1538, %v1546
        %v1566 = vunpack.c.l.s4 1934713408
        %v1567 = vunpack.c.0.s8 %v1566
        %v1568 = vlaneseq
        %v1569 = vshrl.u32 %v1568, 7
        %v1570 = vsub.s32 %v1567, %v1569
        %v1571 = vrot.slane %v1563, %v1570
        %v1573 = vunpack.c.l.s4 1934713408
        %v1574 = vunpack.c.0.s8 %v1573
        %v1575 = vlaneseq
        %v1576 = vshrl.u32 %v1575, 7
        %v1577 = vsub.s32 %v1574, %v1576
        %v1578 = vrot.slane %v1564, %v1577
        %v1579 = vcombine.low %v1554, %v1562
        %v1580 = vcombine.high %v1554, %v1562
        %v1582 = vunpack.c.l.s4 1934713408
        %v1583 = vunpack.c.0.s8 %v1582
        %v1584 = vlaneseq
        %v1585 = vshrl.u32 %v1584, 7
        %v1586 = vsub.s32 %v1583, %v1585
        %v1587 = vrot.slane %v1579, %v1586
        %v1589 = vunpack.c.l.s4 1934713408
        %v1590 = vunpack.c.0.s8 %v1589
        %v1591 = vlaneseq
        %v1592 = vshrl.u32 %v1591, 7
        %v1593 = vsub.s32 %v1590, %v1592
        %v1594 = vrot.slane %v1580, %v1593
        %v1595 = vcombine.low %v1571, %v1587
        %v1596 = vcombine.high %v1571, %v1587
        %v1597 = vcombine.low %v1578, %v1594
        %v1598 = vcombine.high %v1578, %v1594
        %1600 = vrot.lane.b32.xlu0 %v1596, 8
        %v1601 = vpop.permute.xlu0 %1600
        %1604 = vrot.lane.b32.xlu0 %v1597, 16
        %v1605 = vpop.permute.xlu0 %1604
        %1608 = vrot.lane.b32.xlu0 %v1598, 24
        %v1609 = vpop.permute.xlu0 %1608
        %v1611 = vsel %vm818, %v1595, %v1601
        %vm1612 = vcmask 130048
        %v1613 = vsel %vm1612, %v1611, %v1605
        %vm1614 = vcmask 195584
        %v1615 = vsel %vm1614, %v1613, %v1609
        %vm1616 = vcmask 261120
        %1617 = vst.msk [vmem:[%s252] sm:$0xff] %vm1616, %v1615
        %s1618 = sand.u32 %s138, 1
        %s1619 = scalar_lea.sflag [#allocation7], %s1618
        %s1620 = sand.u32 %s138, 1
        %s1621 = smul.addr %s1620, 8
        %s1622 = scalar_lea.vmem [#allocation10], %s1621
        // Predicated region
        $region49: #{tpu_custom_call.1} parent=35 // pred_check
          %p1623 = pneg %p148
        $region50: #{tpu_custom_call.1} parent=35 // pred_check_branch
          %1625 = sbr.rel (%p1623) target = $region52
        $region51: #{tpu_custom_call.1} parent=35 // pred_region
          %s1627 = ssub.s32 128, 128
          %1628 = vsyncadd %s1619, %s1627
          %s1629 = sadd.s32 %s27, %s26
          %s1630 = smul.addr %s1629, 128
          %s1631 = scalar_lea.hbm %s4, %s1630
          %s1633 = sshll.u32 %s1622, 4
          %s1634 = int_to_ptr.vmem [resolvable:$true] %s1633
          %1636 = dma.vmem_to_hbm [thread:$0]  %s1634, 128, %s1631, %s1619
        $region52: #{tpu_custom_call.1} parent=35 // pred_fallthru
          _
      $region36: #{tpu_custom_call.1} parent=5 // pred_fallthru
        _
      %p1637 = scmp.le.s32.totalorder 2, %s17
      // Predicated region
      $region53: #{tpu_custom_call.1} parent=5 // pred_check
        %p1638 = pneg %p1637
      $region54: #{tpu_custom_call.1} parent=5 // pred_check_branch
        %1640 = sbr.rel (%p1638) target = $region56
      $region55: #{tpu_custom_call.1} parent=5 // pred_region
        %s1641 = ssub.s32 %s17, 2
        // Predicated region
        $region57: #{tpu_custom_call.1} parent=55 // pred_check
          %p1642 = pneg %p154
        $region58: #{tpu_custom_call.1} parent=55 // pred_check_branch
          %1644 = sbr.rel (%p1642) target = $region60
        $region59: #{tpu_custom_call.1} parent=55 // pred_region
          %s1645 = sand.u32 %s139, 1
          %s1646 = scalar_lea.sflag [#allocation7], %s1645
          %s1647 = sand.u32 %s139, 1
          %s1648 = smul.addr %s1647, 8
          %s1649 = scalar_lea.vmem [#allocation10], %s1648
          %1650 = dma.done %s1646, 128
        $region60: #{tpu_custom_call.1} parent=55 // pred_fallthru
          _
      $region56: #{tpu_custom_call.1} parent=5 // pred_fallthru
        _
    $region6: #{tpu_custom_call.1} parent=1 // loop_footer
      %s21 = sadd.s32 1, %s17
    $region7: #{tpu_custom_call.1} parent=1 // loop_footer_branch
      %16 = sbr.rel target = $region3
    $region8: #{tpu_custom_call.1} parent=1 // loop_exit
      _
    %1651 = vsyncpa [#allocation6], 1
    %s1652 = scalar_lea.sflag [#allocation6], 1
    %1653 = vsyncpa %s1652, 1
    %1654 = vsyncpa [#allocation9], 1
    %1655 = vsyncpa [#allocation7], 1
    %s1656 = scalar_lea.sflag [#allocation7], 1
    %1657 = vsyncpa %s1656, 1

</llo_original>
